<compile_context>
chip_gen: v7x
topology: tpu7x:2x2x1
jax: 0.10.0
libtpu: 0.0.40
codegen_flags: <defaults>
</compile_context>

<pallas_src>
import functools

import numpy as np
import jax
import jax.numpy as jnp
from jax.experimental import pallas as pl
from jax.experimental.pallas import tpu as pltpu


def _attention_fused_kernel(x_ref, mask_ref, *refs, c_ins, c_out, acts, H, W, center):
    """Fused multi-layer 3x3-conv net for one batch element.

    x_ref    : (1, C_in, H*W)  f32   flattened NCHW input
    mask_ref : (9, H*W)        f32   per-tap border-validity masks (0/1)
    refs     : w_1..w_L (C_out, 9*c_in+1) bf16 packed weights (+bias column),
               o_ref (1, C_out, H*W), then scratches:
                 slab (C_max, 2*center + H*W) f32  -- flat activation + zero halo
                 col  (9*C_max + 1, H*W)      f32  -- im2col slab (+ ones row)
    """
    n_layers = len(c_ins)
    w_refs = refs[:n_layers]
    o_ref = refs[n_layers]
    slab = refs[n_layers + 1]
    col = refs[n_layers + 2]

    HW = H * W
    taps = [(dh, dw) for dh in (-1, 0, 1) for dw in (-1, 0, 1)]

    # Zero the slab once (the halo columns stay zero for the whole grid step),
    # then drop this batch element's activation into the centre.
    slab[...] = jnp.zeros_like(slab)
    slab[0:c_ins[0], center:center + HW] = x_ref[0]

    for li in range(n_layers):
        c_in = c_ins[li]

        # im2col: 9 shifted + border-masked copies of the activation.  Shifts in
        # the flat H*W layout are just static lane-offset reads from the slab;
        # the mask zeroes contributions that would wrap across image rows or
        # fall outside the image (zero-padding semantics of padding=1).
        for t, (dh, dw) in enumerate(taps):
            start = center + dh * W + dw
            patch = slab[0:c_in, start:start + HW]                 # (c_in, HW) f32
            col[t * c_in:(t + 1) * c_in, :] = patch * mask_ref[t:t + 1, :]
        # Ones row -> bias (folded into the last column of the packed weights).
        col[9 * c_in:9 * c_in + 1, :] = jnp.ones((1, HW), jnp.float32)

        # Single MXU matmul per layer: (C_out, 9*c_in+1) @ (9*c_in+1, HW),
        # bf16 operands, f32 accumulation.
        rhs = col[0:9 * c_in + 1, :].astype(jnp.bfloat16)
        y = jnp.dot(w_refs[li][...], rhs, preferred_element_type=jnp.float32)

        if acts[li] == "relu":
            y = jnp.maximum(y, 0.0)          # VPU
        else:
            y = jax.nn.sigmoid(y)            # EUP

        if li + 1 < n_layers:
            slab[0:c_out, center:center + HW] = y                  # stays in VMEM
        else:
            o_ref[0] = y.astype(o_ref.dtype)                       # lane-dense store


def attention_net_forward(x_nchw, layers):
    """layers: list of (w_hwio f32 (3,3,ci,co), bias f32 (co,), act in {"relu","sigmoid"})."""
    N, C_in, H, W = x_nchw.shape
    HW = H * W
    C_out = layers[0][0].shape[-1]
    C_max = max(C_in, C_out)

    # Centre offset of the flat activation slab: 128-aligned and >= W+1 (max tap shift).
    center = max(128, ((W + 1 + 127) // 128) * 128)
    L = HW + 2 * center

    x_flat = x_nchw.reshape(N, C_in, HW)                           # free reshape (NCHW)

    # Pack weights as (C_out, 9*C_in + 1) bf16 slabs whose column order matches the
    # in-kernel im2col row order (tap-major, channel-minor); bias is the last column.
    packed_ws, c_ins, acts = [], [], []
    for w_hwio, b, act in layers:
        kh, kw, ci, co = w_hwio.shape
        wp = jnp.transpose(w_hwio, (3, 0, 1, 2)).reshape(co, kh * kw * ci)
        wp = jnp.concatenate([wp, b.reshape(co, 1)], axis=1)
        packed_ws.append(wp.astype(jnp.bfloat16))
        c_ins.append(ci)
        acts.append(act)

    # Per-tap validity masks (same for every layer), computed host-side.
    hh, ww = np.meshgrid(np.arange(H), np.arange(W), indexing="ij")
    hh, ww = hh.reshape(-1), ww.reshape(-1)
    taps = [(dh, dw) for dh in (-1, 0, 1) for dw in (-1, 0, 1)]
    masks = np.stack(
        [((hh + dh >= 0) & (hh + dh < H) & (ww + dw >= 0) & (ww + dw < W))
         for dh, dw in taps]).astype(np.float32)                   # (9, HW)
    masks = jnp.asarray(masks)

    kernel = functools.partial(
        _attention_fused_kernel,
        c_ins=tuple(c_ins), c_out=C_out, acts=tuple(acts), H=H, W=W, center=center)

    in_specs = [
        pl.BlockSpec((1, C_in, HW), lambda n: (n, 0, 0)),          # x, per batch element
        pl.BlockSpec((9, HW), lambda n: (0, 0)),                   # tap masks
    ]
    for wp in packed_ws:
        in_specs.append(pl.BlockSpec(wp.shape, lambda n: (0, 0)))  # packed weights

    out = pl.pallas_call(
        kernel,
        out_shape=jax.ShapeDtypeStruct((N, C_out, HW), x_nchw.dtype),
        grid=(N,),
        in_specs=in_specs,
        out_specs=pl.BlockSpec((1, C_out, HW), lambda n: (n, 0, 0)),
        scratch_shapes=[
            pltpu.VMEM((C_max, L), jnp.float32),                   # flat activation slab
            pltpu.VMEM((9 * C_max + 1, HW), jnp.float32),          # im2col slab
        ],
        compiler_params=pltpu.CompilerParams(
            dimension_semantics=("parallel",)),                    # batch across TCs (v7x)
    )(x_flat, masks, *packed_ws)

    return out.reshape(N, C_out, H, W)                             # free reshape (NCHW)


def _init_conv(key, c_in, c_out, k=3):
    """Deterministic init matching PyTorch Conv2d default (uniform +- 1/sqrt(fan_in))."""
    kw_key, kb_key = jax.random.split(key)
    bound = 1.0 / np.sqrt(c_in * k * k)
    w = jax.random.uniform(kw_key, (k, k, c_in, c_out), jnp.float32, -bound, bound)  # HWIO
    b = jax.random.uniform(kb_key, (c_out,), jnp.float32, -bound, bound)
    return w, b


class AttentionNetPallas:
    """Pallas/JAX re-implementation of the PyTorch AttentionNet forward pass."""

    def __init__(self, channels_in, channels_out, hidden_layers=1,
                 kernel_att=3, stride_att=1, key=jax.random.PRNGKey(0)):
        assert kernel_att == 3 and stride_att == 1, "kernel specialised for k=3, stride=1"
        self.hidden_layers = hidden_layers
        keys = jax.random.split(key, 5)
        self.layers = [(*_init_conv(keys[0], channels_in, channels_out), "relu")]
        if hidden_layers >= 2:
            self.layers.append((*_init_conv(keys[1], channels_out, channels_out), "relu"))
        if hidden_layers >= 3:
            self.layers.append((*_init_conv(keys[2], channels_out, channels_out), "relu"))
        if hidden_layers >= 4:
            self.layers.append((*_init_conv(keys[3], channels_out, channels_out), "relu"))
        self.layers.append((*_init_conv(keys[4], channels_out, channels_out), "sigmoid"))

    def __call__(self, x_nchw):
        return attention_net_forward(x_nchw, self.layers)


def _reference_forward(model, x_nchw):
    """Pure-JAX (lax.conv) reference with matching bf16 MXU-operand precision."""
    def conv(x_nhwc, w_hwio, b):
        y = jax.lax.conv_general_dilated(
            x_nhwc.astype(jnp.bfloat16), w_hwio.astype(jnp.bfloat16),
            window_strides=(1, 1), padding="SAME",
            dimension_numbers=("NHWC", "HWIO", "NHWC"),
            preferred_element_type=jnp.float32)
        return y + b.astype(jnp.bfloat16).astype(jnp.float32)[None, None, None, :]

    x = jnp.transpose(x_nchw, (0, 2, 3, 1))
    for w, b, act in model.layers:
        x = conv(x, w, b)
        x = jax.nn.relu(x) if act == "relu" else jax.nn.sigmoid(x)
    return jnp.transpose(x, (0, 3, 1, 2))


if __name__ == "__main__":
    key = jax.random.PRNGKey(0)
    k_x, k_p = jax.random.split(key)

    # batch=2, channels_in=4, channels_out=8, spatial=16x16, hidden_layers=2
    # (exercises c1, c2, c5 -- i.e. 3 fused conv layers).
    x = jax.random.normal(k_x, (2, 4, 16, 16), dtype=jnp.float32)
    model = AttentionNetPallas(channels_in=4, channels_out=8, hidden_layers=2, key=k_p)

    out = jax.block_until_ready(model(x))
    assert out.shape == (2, 8, 16, 16), out.shape

    ref = jax.block_until_ready(_reference_forward(model, x))
    err = float(jnp.max(jnp.abs(out - ref)))
    assert jnp.allclose(out, ref, atol=1e-2, rtol=1e-2), f"mismatch vs reference, max|diff|={err}"

    print("KERNEL_OK")
</pallas_src>

<mosaic_0001>
module attributes {stable_mosaic.version = 11 : i64} {
  func.func @_attention_fused_kernel(%arg0: i32, %arg1: memref<1x4x256xf32, #tpu.memory_space<vmem>>, %arg2: memref<9x256xf32, #tpu.memory_space<vmem>>, %arg3: memref<8x37xbf16, #tpu.memory_space<vmem>>, %arg4: memref<8x73xbf16, #tpu.memory_space<vmem>>, %arg5: memref<8x73xbf16, #tpu.memory_space<vmem>>, %arg6: memref<1x8x256xf32, #tpu.memory_space<vmem>>, %arg7: memref<8x512xf32, #tpu.memory_space<vmem>>, %arg8: memref<73x256xf32, #tpu.memory_space<vmem>>) attributes {dimension_semantics = [#tpu.dimension_semantics<parallel>], iteration_bounds = array<i64: 2>, scalar_prefetch = 0 : i64, scratch_operands = 2 : i64, tpu.core_type = #tpu.core_type<tc>, window_params = [{transform_indices = @transform_0, window_bounds = array<i64: 1, 4, 256>}, {pipeline_mode = #tpu.pipeline_mode<synchronous>, transform_indices = @transform_1, window_bounds = array<i64: 9, 256>}, {pipeline_mode = #tpu.pipeline_mode<synchronous>, transform_indices = @transform_2, window_bounds = array<i64: 8, 37>}, {pipeline_mode = #tpu.pipeline_mode<synchronous>, transform_indices = @transform_3, window_bounds = array<i64: 8, 73>}, {pipeline_mode = #tpu.pipeline_mode<synchronous>, transform_indices = @transform_4, window_bounds = array<i64: 8, 73>}, {transform_indices = @transform_5, window_bounds = array<i64: 1, 8, 256>}]} {
    %cst = arith.constant 0.000000e+00 : f32
    %0 = vector.broadcast %cst : f32 to vector<8x512xf32>
    %c0 = arith.constant 0 : index
    %c0_0 = arith.constant 0 : index
    %1 = vector.load %arg7[%c0, %c0_0] : memref<8x512xf32, #tpu.memory_space<vmem>>, vector<8x512xf32>
    tpu.vector_store %arg7[%c0, %c0_0], %0 {strides = array<i32>} : memref<8x512xf32, #tpu.memory_space<vmem>>, vector<8x512xf32>,
    %c0_1 = arith.constant 0 : index
    %c0_2 = arith.constant 0 : index
    %c0_3 = arith.constant 0 : index
    %2 = vector.load %arg1[%c0_1, %c0_2, %c0_3] : memref<1x4x256xf32, #tpu.memory_space<vmem>>, vector<1x4x256xf32>
    %3 = vector.shape_cast %2 : vector<1x4x256xf32> to vector<4x256xf32>
    %c0_4 = arith.constant 0 : index
    %c128 = arith.constant 128 : index
    %4 = vector.load %arg7[%c0_4, %c128] : memref<8x512xf32, #tpu.memory_space<vmem>>, vector<4x256xf32>
    tpu.vector_store %arg7[%c0_4, %c128], %3 {strides = array<i32>} : memref<8x512xf32, #tpu.memory_space<vmem>>, vector<4x256xf32>,
    %c0_5 = arith.constant 0 : index
    %c111 = arith.constant 111 : index
    %5 = vector.load %arg7[%c0_5, %c111] : memref<8x512xf32, #tpu.memory_space<vmem>>, vector<4x256xf32>
    %c0_6 = arith.constant 0 : index
    %c0_7 = arith.constant 0 : index
    %6 = vector.load %arg2[%c0_6, %c0_7] : memref<9x256xf32, #tpu.memory_space<vmem>>, vector<1x256xf32>
    %7 = vector.broadcast %6 : vector<1x256xf32> to vector<4x256xf32>
    %8 = arith.mulf %5, %7 : vector<4x256xf32>
    %c0_8 = arith.constant 0 : index
    %c0_9 = arith.constant 0 : index
    %9 = vector.load %arg8[%c0_8, %c0_9] : memref<73x256xf32, #tpu.memory_space<vmem>>, vector<4x256xf32>
    tpu.vector_store %arg8[%c0_8, %c0_9], %8 {strides = array<i32>} : memref<73x256xf32, #tpu.memory_space<vmem>>, vector<4x256xf32>,
    %c0_10 = arith.constant 0 : index
    %c112 = arith.constant 112 : index
    %10 = vector.load %arg7[%c0_10, %c112] : memref<8x512xf32, #tpu.memory_space<vmem>>, vector<4x256xf32>
    %c1 = arith.constant 1 : index
    %c0_11 = arith.constant 0 : index
    %11 = vector.load %arg2[%c1, %c0_11] : memref<9x256xf32, #tpu.memory_space<vmem>>, vector<1x256xf32>
    %12 = vector.broadcast %11 : vector<1x256xf32> to vector<4x256xf32>
    %13 = arith.mulf %10, %12 : vector<4x256xf32>
    %c4 = arith.constant 4 : index
    %c0_12 = arith.constant 0 : index
    %14 = vector.load %arg8[%c4, %c0_12] : memref<73x256xf32, #tpu.memory_space<vmem>>, vector<4x256xf32>
    tpu.vector_store %arg8[%c4, %c0_12], %13 {strides = array<i32>} : memref<73x256xf32, #tpu.memory_space<vmem>>, vector<4x256xf32>,
    %c0_13 = arith.constant 0 : index
    %c113 = arith.constant 113 : index
    %15 = vector.load %arg7[%c0_13, %c113] : memref<8x512xf32, #tpu.memory_space<vmem>>, vector<4x256xf32>
    %c2 = arith.constant 2 : index
    %c0_14 = arith.constant 0 : index
    %16 = vector.load %arg2[%c2, %c0_14] : memref<9x256xf32, #tpu.memory_space<vmem>>, vector<1x256xf32>
    %17 = vector.broadcast %16 : vector<1x256xf32> to vector<4x256xf32>
    %18 = arith.mulf %15, %17 : vector<4x256xf32>
    %c8 = arith.constant 8 : index
    %c0_15 = arith.constant 0 : index
    %19 = vector.load %arg8[%c8, %c0_15] : memref<73x256xf32, #tpu.memory_space<vmem>>, vector<4x256xf32>
    tpu.vector_store %arg8[%c8, %c0_15], %18 {strides = array<i32>} : memref<73x256xf32, #tpu.memory_space<vmem>>, vector<4x256xf32>,
    %c0_16 = arith.constant 0 : index
    %c127 = arith.constant 127 : index
    %20 = vector.load %arg7[%c0_16, %c127] : memref<8x512xf32, #tpu.memory_space<vmem>>, vector<4x256xf32>
    %c3 = arith.constant 3 : index
    %c0_17 = arith.constant 0 : index
    %21 = vector.load %arg2[%c3, %c0_17] : memref<9x256xf32, #tpu.memory_space<vmem>>, vector<1x256xf32>
    %22 = vector.broadcast %21 : vector<1x256xf32> to vector<4x256xf32>
    %23 = arith.mulf %20, %22 : vector<4x256xf32>
    %c12 = arith.constant 12 : index
    %c0_18 = arith.constant 0 : index
    %24 = vector.load %arg8[%c12, %c0_18] : memref<73x256xf32, #tpu.memory_space<vmem>>, vector<4x256xf32>
    tpu.vector_store %arg8[%c12, %c0_18], %23 {strides = array<i32>} : memref<73x256xf32, #tpu.memory_space<vmem>>, vector<4x256xf32>,
    %c0_19 = arith.constant 0 : index
    %c128_20 = arith.constant 128 : index
    %25 = vector.load %arg7[%c0_19, %c128_20] : memref<8x512xf32, #tpu.memory_space<vmem>>, vector<4x256xf32>
    %c4_21 = arith.constant 4 : index
    %c0_22 = arith.constant 0 : index
    %26 = vector.load %arg2[%c4_21, %c0_22] : memref<9x256xf32, #tpu.memory_space<vmem>>, vector<1x256xf32>
    %27 = vector.broadcast %26 : vector<1x256xf32> to vector<4x256xf32>
    %28 = arith.mulf %25, %27 : vector<4x256xf32>
    %c16 = arith.constant 16 : index
    %c0_23 = arith.constant 0 : index
    %29 = vector.load %arg8[%c16, %c0_23] : memref<73x256xf32, #tpu.memory_space<vmem>>, vector<4x256xf32>
    tpu.vector_store %arg8[%c16, %c0_23], %28 {strides = array<i32>} : memref<73x256xf32, #tpu.memory_space<vmem>>, vector<4x256xf32>,
    %c0_24 = arith.constant 0 : index
    %c129 = arith.constant 129 : index
    %30 = vector.load %arg7[%c0_24, %c129] : memref<8x512xf32, #tpu.memory_space<vmem>>, vector<4x256xf32>
    %c5 = arith.constant 5 : index
    %c0_25 = arith.constant 0 : index
    %31 = vector.load %arg2[%c5, %c0_25] : memref<9x256xf32, #tpu.memory_space<vmem>>, vector<1x256xf32>
    %32 = vector.broadcast %31 : vector<1x256xf32> to vector<4x256xf32>
    %33 = arith.mulf %30, %32 : vector<4x256xf32>
    %c20 = arith.constant 20 : index
    %c0_26 = arith.constant 0 : index
    %34 = vector.load %arg8[%c20, %c0_26] : memref<73x256xf32, #tpu.memory_space<vmem>>, vector<4x256xf32>
    tpu.vector_store %arg8[%c20, %c0_26], %33 {strides = array<i32>} : memref<73x256xf32, #tpu.memory_space<vmem>>, vector<4x256xf32>,
    %c0_27 = arith.constant 0 : index
    %c143 = arith.constant 143 : index
    %35 = vector.load %arg7[%c0_27, %c143] : memref<8x512xf32, #tpu.memory_space<vmem>>, vector<4x256xf32>
    %c6 = arith.constant 6 : index
    %c0_28 = arith.constant 0 : index
    %36 = vector.load %arg2[%c6, %c0_28] : memref<9x256xf32, #tpu.memory_space<vmem>>, vector<1x256xf32>
    %37 = vector.broadcast %36 : vector<1x256xf32> to vector<4x256xf32>
    %38 = arith.mulf %35, %37 : vector<4x256xf32>
    %c24 = arith.constant 24 : index
    %c0_29 = arith.constant 0 : index
    %39 = vector.load %arg8[%c24, %c0_29] : memref<73x256xf32, #tpu.memory_space<vmem>>, vector<4x256xf32>
    tpu.vector_store %arg8[%c24, %c0_29], %38 {strides = array<i32>} : memref<73x256xf32, #tpu.memory_space<vmem>>, vector<4x256xf32>,
    %c0_30 = arith.constant 0 : index
    %c144 = arith.constant 144 : index
    %40 = vector.load %arg7[%c0_30, %c144] : memref<8x512xf32, #tpu.memory_space<vmem>>, vector<4x256xf32>
    %c7 = arith.constant 7 : index
    %c0_31 = arith.constant 0 : index
    %41 = vector.load %arg2[%c7, %c0_31] : memref<9x256xf32, #tpu.memory_space<vmem>>, vector<1x256xf32>
    %42 = vector.broadcast %41 : vector<1x256xf32> to vector<4x256xf32>
    %43 = arith.mulf %40, %42 : vector<4x256xf32>
    %c28 = arith.constant 28 : index
    %c0_32 = arith.constant 0 : index
    %44 = vector.load %arg8[%c28, %c0_32] : memref<73x256xf32, #tpu.memory_space<vmem>>, vector<4x256xf32>
    tpu.vector_store %arg8[%c28, %c0_32], %43 {strides = array<i32>} : memref<73x256xf32, #tpu.memory_space<vmem>>, vector<4x256xf32>,
    %c0_33 = arith.constant 0 : index
    %c145 = arith.constant 145 : index
    %45 = vector.load %arg7[%c0_33, %c145] : memref<8x512xf32, #tpu.memory_space<vmem>>, vector<4x256xf32>
    %c8_34 = arith.constant 8 : index
    %c0_35 = arith.constant 0 : index
    %46 = vector.load %arg2[%c8_34, %c0_35] : memref<9x256xf32, #tpu.memory_space<vmem>>, vector<1x256xf32>
    %47 = vector.broadcast %46 : vector<1x256xf32> to vector<4x256xf32>
    %48 = arith.mulf %45, %47 : vector<4x256xf32>
    %c32 = arith.constant 32 : index
    %c0_36 = arith.constant 0 : index
    %49 = vector.load %arg8[%c32, %c0_36] : memref<73x256xf32, #tpu.memory_space<vmem>>, vector<4x256xf32>
    tpu.vector_store %arg8[%c32, %c0_36], %48 {strides = array<i32>} : memref<73x256xf32, #tpu.memory_space<vmem>>, vector<4x256xf32>,
    %cst_37 = arith.constant 1.000000e+00 : f32
    %50 = vector.broadcast %cst_37 : f32 to vector<1x256xf32>
    %c36 = arith.constant 36 : index
    %c0_38 = arith.constant 0 : index
    %51 = vector.load %arg8[%c36, %c0_38] : memref<73x256xf32, #tpu.memory_space<vmem>>, vector<1x256xf32>
    tpu.vector_store %arg8[%c36, %c0_38], %50 {strides = array<i32>} : memref<73x256xf32, #tpu.memory_space<vmem>>, vector<1x256xf32>,
    %c0_39 = arith.constant 0 : index
    %c0_40 = arith.constant 0 : index
    %52 = vector.load %arg8[%c0_39, %c0_40] : memref<73x256xf32, #tpu.memory_space<vmem>>, vector<37x256xf32>
    %53 = arith.truncf %52 : vector<37x256xf32> to vector<37x256xbf16>
    %c0_41 = arith.constant 0 : index
    %c0_42 = arith.constant 0 : index
    %54 = vector.load %arg3[%c0_41, %c0_42] : memref<8x37xbf16, #tpu.memory_space<vmem>>, vector<8x37xbf16>
    %cst_43 = arith.constant dense<0.000000e+00> : vector<8x256xf32>
    %55 = tpu.matmul %54, %53, %cst_43 {dimension_numbers = #tpu.dot_dimension_numbers<[1], [0], [0], [1], [0, 0, 1, 1], [], []>} : vector<8x37xbf16>, vector<37x256xbf16>, vector<8x256xf32> -> vector<8x256xf32>
    %cst_44 = arith.constant 0.000000e+00 : f32
    %56 = vector.broadcast %cst_44 : f32 to vector<8x256xf32>
    %57 = arith.maximumf %55, %56 : vector<8x256xf32>
    %c0_45 = arith.constant 0 : index
    %c128_46 = arith.constant 128 : index
    %58 = vector.load %arg7[%c0_45, %c128_46] : memref<8x512xf32, #tpu.memory_space<vmem>>, vector<8x256xf32>
    tpu.vector_store %arg7[%c0_45, %c128_46], %57 {strides = array<i32>} : memref<8x512xf32, #tpu.memory_space<vmem>>, vector<8x256xf32>,
    %c0_47 = arith.constant 0 : index
    %c111_48 = arith.constant 111 : index
    %59 = vector.load %arg7[%c0_47, %c111_48] : memref<8x512xf32, #tpu.memory_space<vmem>>, vector<8x256xf32>
    %c0_49 = arith.constant 0 : index
    %c0_50 = arith.constant 0 : index
    %60 = vector.load %arg2[%c0_49, %c0_50] : memref<9x256xf32, #tpu.memory_space<vmem>>, vector<1x256xf32>
    %61 = vector.broadcast %60 : vector<1x256xf32> to vector<8x256xf32>
    %62 = arith.mulf %59, %61 : vector<8x256xf32>
    %c0_51 = arith.constant 0 : index
    %c0_52 = arith.constant 0 : index
    %63 = vector.load %arg8[%c0_51, %c0_52] : memref<73x256xf32, #tpu.memory_space<vmem>>, vector<8x256xf32>
    tpu.vector_store %arg8[%c0_51, %c0_52], %62 {strides = array<i32>} : memref<73x256xf32, #tpu.memory_space<vmem>>, vector<8x256xf32>,
    %c0_53 = arith.constant 0 : index
    %c112_54 = arith.constant 112 : index
    %64 = vector.load %arg7[%c0_53, %c112_54] : memref<8x512xf32, #tpu.memory_space<vmem>>, vector<8x256xf32>
    %c1_55 = arith.constant 1 : index
    %c0_56 = arith.constant 0 : index
    %65 = vector.load %arg2[%c1_55, %c0_56] : memref<9x256xf32, #tpu.memory_space<vmem>>, vector<1x256xf32>
    %66 = vector.broadcast %65 : vector<1x256xf32> to vector<8x256xf32>
    %67 = arith.mulf %64, %66 : vector<8x256xf32>
    %c8_57 = arith.constant 8 : index
    %c0_58 = arith.constant 0 : index
    %68 = vector.load %arg8[%c8_57, %c0_58] : memref<73x256xf32, #tpu.memory_space<vmem>>, vector<8x256xf32>
    tpu.vector_store %arg8[%c8_57, %c0_58], %67 {strides = array<i32>} : memref<73x256xf32, #tpu.memory_space<vmem>>, vector<8x256xf32>,
    %c0_59 = arith.constant 0 : index
    %c113_60 = arith.constant 113 : index
    %69 = vector.load %arg7[%c0_59, %c113_60] : memref<8x512xf32, #tpu.memory_space<vmem>>, vector<8x256xf32>
    %c2_61 = arith.constant 2 : index
    %c0_62 = arith.constant 0 : index
    %70 = vector.load %arg2[%c2_61, %c0_62] : memref<9x256xf32, #tpu.memory_space<vmem>>, vector<1x256xf32>
    %71 = vector.broadcast %70 : vector<1x256xf32> to vector<8x256xf32>
    %72 = arith.mulf %69, %71 : vector<8x256xf32>
    %c16_63 = arith.constant 16 : index
    %c0_64 = arith.constant 0 : index
    %73 = vector.load %arg8[%c16_63, %c0_64] : memref<73x256xf32, #tpu.memory_space<vmem>>, vector<8x256xf32>
    tpu.vector_store %arg8[%c16_63, %c0_64], %72 {strides = array<i32>} : memref<73x256xf32, #tpu.memory_space<vmem>>, vector<8x256xf32>,
    %c0_65 = arith.constant 0 : index
    %c127_66 = arith.constant 127 : index
    %74 = vector.load %arg7[%c0_65, %c127_66] : memref<8x512xf32, #tpu.memory_space<vmem>>, vector<8x256xf32>
    %c3_67 = arith.constant 3 : index
    %c0_68 = arith.constant 0 : index
    %75 = vector.load %arg2[%c3_67, %c0_68] : memref<9x256xf32, #tpu.memory_space<vmem>>, vector<1x256xf32>
    %76 = vector.broadcast %75 : vector<1x256xf32> to vector<8x256xf32>
    %77 = arith.mulf %74, %76 : vector<8x256xf32>
    %c24_69 = arith.constant 24 : index
    %c0_70 = arith.constant 0 : index
    %78 = vector.load %arg8[%c24_69, %c0_70] : memref<73x256xf32, #tpu.memory_space<vmem>>, vector<8x256xf32>
    tpu.vector_store %arg8[%c24_69, %c0_70], %77 {strides = array<i32>} : memref<73x256xf32, #tpu.memory_space<vmem>>, vector<8x256xf32>,
    %c0_71 = arith.constant 0 : index
    %c128_72 = arith.constant 128 : index
    %79 = vector.load %arg7[%c0_71, %c128_72] : memref<8x512xf32, #tpu.memory_space<vmem>>, vector<8x256xf32>
    %c4_73 = arith.constant 4 : index
    %c0_74 = arith.constant 0 : index
    %80 = vector.load %arg2[%c4_73, %c0_74] : memref<9x256xf32, #tpu.memory_space<vmem>>, vector<1x256xf32>
    %81 = vector.broadcast %80 : vector<1x256xf32> to vector<8x256xf32>
    %82 = arith.mulf %79, %81 : vector<8x256xf32>
    %c32_75 = arith.constant 32 : index
    %c0_76 = arith.constant 0 : index
    %83 = vector.load %arg8[%c32_75, %c0_76] : memref<73x256xf32, #tpu.memory_space<vmem>>, vector<8x256xf32>
    tpu.vector_store %arg8[%c32_75, %c0_76], %82 {strides = array<i32>} : memref<73x256xf32, #tpu.memory_space<vmem>>, vector<8x256xf32>,
    %c0_77 = arith.constant 0 : index
    %c129_78 = arith.constant 129 : index
    %84 = vector.load %arg7[%c0_77, %c129_78] : memref<8x512xf32, #tpu.memory_space<vmem>>, vector<8x256xf32>
    %c5_79 = arith.constant 5 : index
    %c0_80 = arith.constant 0 : index
    %85 = vector.load %arg2[%c5_79, %c0_80] : memref<9x256xf32, #tpu.memory_space<vmem>>, vector<1x256xf32>
    %86 = vector.broadcast %85 : vector<1x256xf32> to vector<8x256xf32>
    %87 = arith.mulf %84, %86 : vector<8x256xf32>
    %c40 = arith.constant 40 : index
    %c0_81 = arith.constant 0 : index
    %88 = vector.load %arg8[%c40, %c0_81] : memref<73x256xf32, #tpu.memory_space<vmem>>, vector<8x256xf32>
    tpu.vector_store %arg8[%c40, %c0_81], %87 {strides = array<i32>} : memref<73x256xf32, #tpu.memory_space<vmem>>, vector<8x256xf32>,
    %c0_82 = arith.constant 0 : index
    %c143_83 = arith.constant 143 : index
    %89 = vector.load %arg7[%c0_82, %c143_83] : memref<8x512xf32, #tpu.memory_space<vmem>>, vector<8x256xf32>
    %c6_84 = arith.constant 6 : index
    %c0_85 = arith.constant 0 : index
    %90 = vector.load %arg2[%c6_84, %c0_85] : memref<9x256xf32, #tpu.memory_space<vmem>>, vector<1x256xf32>
    %91 = vector.broadcast %90 : vector<1x256xf32> to vector<8x256xf32>
    %92 = arith.mulf %89, %91 : vector<8x256xf32>
    %c48 = arith.constant 48 : index
    %c0_86 = arith.constant 0 : index
    %93 = vector.load %arg8[%c48, %c0_86] : memref<73x256xf32, #tpu.memory_space<vmem>>, vector<8x256xf32>
    tpu.vector_store %arg8[%c48, %c0_86], %92 {strides = array<i32>} : memref<73x256xf32, #tpu.memory_space<vmem>>, vector<8x256xf32>,
    %c0_87 = arith.constant 0 : index
    %c144_88 = arith.constant 144 : index
    %94 = vector.load %arg7[%c0_87, %c144_88] : memref<8x512xf32, #tpu.memory_space<vmem>>, vector<8x256xf32>
    %c7_89 = arith.constant 7 : index
    %c0_90 = arith.constant 0 : index
    %95 = vector.load %arg2[%c7_89, %c0_90] : memref<9x256xf32, #tpu.memory_space<vmem>>, vector<1x256xf32>
    %96 = vector.broadcast %95 : vector<1x256xf32> to vector<8x256xf32>
    %97 = arith.mulf %94, %96 : vector<8x256xf32>
    %c56 = arith.constant 56 : index
    %c0_91 = arith.constant 0 : index
    %98 = vector.load %arg8[%c56, %c0_91] : memref<73x256xf32, #tpu.memory_space<vmem>>, vector<8x256xf32>
    tpu.vector_store %arg8[%c56, %c0_91], %97 {strides = array<i32>} : memref<73x256xf32, #tpu.memory_space<vmem>>, vector<8x256xf32>,
    %c0_92 = arith.constant 0 : index
    %c145_93 = arith.constant 145 : index
    %99 = vector.load %arg7[%c0_92, %c145_93] : memref<8x512xf32, #tpu.memory_space<vmem>>, vector<8x256xf32>
    %c8_94 = arith.constant 8 : index
    %c0_95 = arith.constant 0 : index
    %100 = vector.load %arg2[%c8_94, %c0_95] : memref<9x256xf32, #tpu.memory_space<vmem>>, vector<1x256xf32>
    %101 = vector.broadcast %100 : vector<1x256xf32> to vector<8x256xf32>
    %102 = arith.mulf %99, %101 : vector<8x256xf32>
    %c64 = arith.constant 64 : index
    %c0_96 = arith.constant 0 : index
    %103 = vector.load %arg8[%c64, %c0_96] : memref<73x256xf32, #tpu.memory_space<vmem>>, vector<8x256xf32>
    tpu.vector_store %arg8[%c64, %c0_96], %102 {strides = array<i32>} : memref<73x256xf32, #tpu.memory_space<vmem>>, vector<8x256xf32>,
    %cst_97 = arith.constant 1.000000e+00 : f32
    %104 = vector.broadcast %cst_97 : f32 to vector<1x256xf32>
    %c72 = arith.constant 72 : index
    %c0_98 = arith.constant 0 : index
    %105 = vector.load %arg8[%c72, %c0_98] : memref<73x256xf32, #tpu.memory_space<vmem>>, vector<1x256xf32>
    tpu.vector_store %arg8[%c72, %c0_98], %104 {strides = array<i32>} : memref<73x256xf32, #tpu.memory_space<vmem>>, vector<1x256xf32>,
    %c0_99 = arith.constant 0 : index
    %c0_100 = arith.constant 0 : index
    %106 = vector.load %arg8[%c0_99, %c0_100] : memref<73x256xf32, #tpu.memory_space<vmem>>, vector<73x256xf32>
    %107 = arith.truncf %106 : vector<73x256xf32> to vector<73x256xbf16>
    %c0_101 = arith.constant 0 : index
    %c0_102 = arith.constant 0 : index
    %108 = vector.load %arg4[%c0_101, %c0_102] : memref<8x73xbf16, #tpu.memory_space<vmem>>, vector<8x73xbf16>
    %cst_103 = arith.constant dense<0.000000e+00> : vector<8x256xf32>
    %109 = tpu.matmul %108, %107, %cst_103 {dimension_numbers = #tpu.dot_dimension_numbers<[1], [0], [0], [1], [0, 0, 1, 1], [], []>} : vector<8x73xbf16>, vector<73x256xbf16>, vector<8x256xf32> -> vector<8x256xf32>
    %cst_104 = arith.constant 0.000000e+00 : f32
    %110 = vector.broadcast %cst_104 : f32 to vector<8x256xf32>
    %111 = arith.maximumf %109, %110 : vector<8x256xf32>
    %c0_105 = arith.constant 0 : index
    %c128_106 = arith.constant 128 : index
    %112 = vector.load %arg7[%c0_105, %c128_106] : memref<8x512xf32, #tpu.memory_space<vmem>>, vector<8x256xf32>
    tpu.vector_store %arg7[%c0_105, %c128_106], %111 {strides = array<i32>} : memref<8x512xf32, #tpu.memory_space<vmem>>, vector<8x256xf32>,
    %c0_107 = arith.constant 0 : index
    %c111_108 = arith.constant 111 : index
    %113 = vector.load %arg7[%c0_107, %c111_108] : memref<8x512xf32, #tpu.memory_space<vmem>>, vector<8x256xf32>
    %c0_109 = arith.constant 0 : index
    %c0_110 = arith.constant 0 : index
    %114 = vector.load %arg2[%c0_109, %c0_110] : memref<9x256xf32, #tpu.memory_space<vmem>>, vector<1x256xf32>
    %115 = vector.broadcast %114 : vector<1x256xf32> to vector<8x256xf32>
    %116 = arith.mulf %113, %115 : vector<8x256xf32>
    %c0_111 = arith.constant 0 : index
    %c0_112 = arith.constant 0 : index
    %117 = vector.load %arg8[%c0_111, %c0_112] : memref<73x256xf32, #tpu.memory_space<vmem>>, vector<8x256xf32>
    tpu.vector_store %arg8[%c0_111, %c0_112], %116 {strides = array<i32>} : memref<73x256xf32, #tpu.memory_space<vmem>>, vector<8x256xf32>,
    %c0_113 = arith.constant 0 : index
    %c112_114 = arith.constant 112 : index
    %118 = vector.load %arg7[%c0_113, %c112_114] : memref<8x512xf32, #tpu.memory_space<vmem>>, vector<8x256xf32>
    %c1_115 = arith.constant 1 : index
    %c0_116 = arith.constant 0 : index
    %119 = vector.load %arg2[%c1_115, %c0_116] : memref<9x256xf32, #tpu.memory_space<vmem>>, vector<1x256xf32>
    %120 = vector.broadcast %119 : vector<1x256xf32> to vector<8x256xf32>
    %121 = arith.mulf %118, %120 : vector<8x256xf32>
    %c8_117 = arith.constant 8 : index
    %c0_118 = arith.constant 0 : index
    %122 = vector.load %arg8[%c8_117, %c0_118] : memref<73x256xf32, #tpu.memory_space<vmem>>, vector<8x256xf32>
    tpu.vector_store %arg8[%c8_117, %c0_118], %121 {strides = array<i32>} : memref<73x256xf32, #tpu.memory_space<vmem>>, vector<8x256xf32>,
    %c0_119 = arith.constant 0 : index
    %c113_120 = arith.constant 113 : index
    %123 = vector.load %arg7[%c0_119, %c113_120] : memref<8x512xf32, #tpu.memory_space<vmem>>, vector<8x256xf32>
    %c2_121 = arith.constant 2 : index
    %c0_122 = arith.constant 0 : index
    %124 = vector.load %arg2[%c2_121, %c0_122] : memref<9x256xf32, #tpu.memory_space<vmem>>, vector<1x256xf32>
    %125 = vector.broadcast %124 : vector<1x256xf32> to vector<8x256xf32>
    %126 = arith.mulf %123, %125 : vector<8x256xf32>
    %c16_123 = arith.constant 16 : index
    %c0_124 = arith.constant 0 : index
    %127 = vector.load %arg8[%c16_123, %c0_124] : memref<73x256xf32, #tpu.memory_space<vmem>>, vector<8x256xf32>
    tpu.vector_store %arg8[%c16_123, %c0_124], %126 {strides = array<i32>} : memref<73x256xf32, #tpu.memory_space<vmem>>, vector<8x256xf32>,
    %c0_125 = arith.constant 0 : index
    %c127_126 = arith.constant 127 : index
    %128 = vector.load %arg7[%c0_125, %c127_126] : memref<8x512xf32, #tpu.memory_space<vmem>>, vector<8x256xf32>
    %c3_127 = arith.constant 3 : index
    %c0_128 = arith.constant 0 : index
    %129 = vector.load %arg2[%c3_127, %c0_128] : memref<9x256xf32, #tpu.memory_space<vmem>>, vector<1x256xf32>
    %130 = vector.broadcast %129 : vector<1x256xf32> to vector<8x256xf32>
    %131 = arith.mulf %128, %130 : vector<8x256xf32>
    %c24_129 = arith.constant 24 : index
    %c0_130 = arith.constant 0 : index
    %132 = vector.load %arg8[%c24_129, %c0_130] : memref<73x256xf32, #tpu.memory_space<vmem>>, vector<8x256xf32>
    tpu.vector_store %arg8[%c24_129, %c0_130], %131 {strides = array<i32>} : memref<73x256xf32, #tpu.memory_space<vmem>>, vector<8x256xf32>,
    %c0_131 = arith.constant 0 : index
    %c128_132 = arith.constant 128 : index
    %133 = vector.load %arg7[%c0_131, %c128_132] : memref<8x512xf32, #tpu.memory_space<vmem>>, vector<8x256xf32>
    %c4_133 = arith.constant 4 : index
    %c0_134 = arith.constant 0 : index
    %134 = vector.load %arg2[%c4_133, %c0_134] : memref<9x256xf32, #tpu.memory_space<vmem>>, vector<1x256xf32>
    %135 = vector.broadcast %134 : vector<1x256xf32> to vector<8x256xf32>
    %136 = arith.mulf %133, %135 : vector<8x256xf32>
    %c32_135 = arith.constant 32 : index
    %c0_136 = arith.constant 0 : index
    %137 = vector.load %arg8[%c32_135, %c0_136] : memref<73x256xf32, #tpu.memory_space<vmem>>, vector<8x256xf32>
    tpu.vector_store %arg8[%c32_135, %c0_136], %136 {strides = array<i32>} : memref<73x256xf32, #tpu.memory_space<vmem>>, vector<8x256xf32>,
    %c0_137 = arith.constant 0 : index
    %c129_138 = arith.constant 129 : index
    %138 = vector.load %arg7[%c0_137, %c129_138] : memref<8x512xf32, #tpu.memory_space<vmem>>, vector<8x256xf32>
    %c5_139 = arith.constant 5 : index
    %c0_140 = arith.constant 0 : index
    %139 = vector.load %arg2[%c5_139, %c0_140] : memref<9x256xf32, #tpu.memory_space<vmem>>, vector<1x256xf32>
    %140 = vector.broadcast %139 : vector<1x256xf32> to vector<8x256xf32>
    %141 = arith.mulf %138, %140 : vector<8x256xf32>
    %c40_141 = arith.constant 40 : index
    %c0_142 = arith.constant 0 : index
    %142 = vector.load %arg8[%c40_141, %c0_142] : memref<73x256xf32, #tpu.memory_space<vmem>>, vector<8x256xf32>
    tpu.vector_store %arg8[%c40_141, %c0_142], %141 {strides = array<i32>} : memref<73x256xf32, #tpu.memory_space<vmem>>, vector<8x256xf32>,
    %c0_143 = arith.constant 0 : index
    %c143_144 = arith.constant 143 : index
    %143 = vector.load %arg7[%c0_143, %c143_144] : memref<8x512xf32, #tpu.memory_space<vmem>>, vector<8x256xf32>
    %c6_145 = arith.constant 6 : index
    %c0_146 = arith.constant 0 : index
    %144 = vector.load %arg2[%c6_145, %c0_146] : memref<9x256xf32, #tpu.memory_space<vmem>>, vector<1x256xf32>
    %145 = vector.broadcast %144 : vector<1x256xf32> to vector<8x256xf32>
    %146 = arith.mulf %143, %145 : vector<8x256xf32>
    %c48_147 = arith.constant 48 : index
    %c0_148 = arith.constant 0 : index
    %147 = vector.load %arg8[%c48_147, %c0_148] : memref<73x256xf32, #tpu.memory_space<vmem>>, vector<8x256xf32>
    tpu.vector_store %arg8[%c48_147, %c0_148], %146 {strides = array<i32>} : memref<73x256xf32, #tpu.memory_space<vmem>>, vector<8x256xf32>,
    %c0_149 = arith.constant 0 : index
    %c144_150 = arith.constant 144 : index
    %148 = vector.load %arg7[%c0_149, %c144_150] : memref<8x512xf32, #tpu.memory_space<vmem>>, vector<8x256xf32>
    %c7_151 = arith.constant 7 : index
    %c0_152 = arith.constant 0 : index
    %149 = vector.load %arg2[%c7_151, %c0_152] : memref<9x256xf32, #tpu.memory_space<vmem>>, vector<1x256xf32>
    %150 = vector.broadcast %149 : vector<1x256xf32> to vector<8x256xf32>
    %151 = arith.mulf %148, %150 : vector<8x256xf32>
    %c56_153 = arith.constant 56 : index
    %c0_154 = arith.constant 0 : index
    %152 = vector.load %arg8[%c56_153, %c0_154] : memref<73x256xf32, #tpu.memory_space<vmem>>, vector<8x256xf32>
    tpu.vector_store %arg8[%c56_153, %c0_154], %151 {strides = array<i32>} : memref<73x256xf32, #tpu.memory_space<vmem>>, vector<8x256xf32>,
    %c0_155 = arith.constant 0 : index
    %c145_156 = arith.constant 145 : index
    %153 = vector.load %arg7[%c0_155, %c145_156] : memref<8x512xf32, #tpu.memory_space<vmem>>, vector<8x256xf32>
    %c8_157 = arith.constant 8 : index
    %c0_158 = arith.constant 0 : index
    %154 = vector.load %arg2[%c8_157, %c0_158] : memref<9x256xf32, #tpu.memory_space<vmem>>, vector<1x256xf32>
    %155 = vector.broadcast %154 : vector<1x256xf32> to vector<8x256xf32>
    %156 = arith.mulf %153, %155 : vector<8x256xf32>
    %c64_159 = arith.constant 64 : index
    %c0_160 = arith.constant 0 : index
    %157 = vector.load %arg8[%c64_159, %c0_160] : memref<73x256xf32, #tpu.memory_space<vmem>>, vector<8x256xf32>
    tpu.vector_store %arg8[%c64_159, %c0_160], %156 {strides = array<i32>} : memref<73x256xf32, #tpu.memory_space<vmem>>, vector<8x256xf32>,
    %cst_161 = arith.constant 1.000000e+00 : f32
    %158 = vector.broadcast %cst_161 : f32 to vector<1x256xf32>
    %c72_162 = arith.constant 72 : index
    %c0_163 = arith.constant 0 : index
    %159 = vector.load %arg8[%c72_162, %c0_163] : memref<73x256xf32, #tpu.memory_space<vmem>>, vector<1x256xf32>
    tpu.vector_store %arg8[%c72_162, %c0_163], %158 {strides = array<i32>} : memref<73x256xf32, #tpu.memory_space<vmem>>, vector<1x256xf32>,
    %c0_164 = arith.constant 0 : index
    %c0_165 = arith.constant 0 : index
    %160 = vector.load %arg8[%c0_164, %c0_165] : memref<73x256xf32, #tpu.memory_space<vmem>>, vector<73x256xf32>
    %161 = arith.truncf %160 : vector<73x256xf32> to vector<73x256xbf16>
    %c0_166 = arith.constant 0 : index
    %c0_167 = arith.constant 0 : index
    %162 = vector.load %arg5[%c0_166, %c0_167] : memref<8x73xbf16, #tpu.memory_space<vmem>>, vector<8x73xbf16>
    %cst_168 = arith.constant dense<0.000000e+00> : vector<8x256xf32>
    %163 = tpu.matmul %162, %161, %cst_168 {dimension_numbers = #tpu.dot_dimension_numbers<[1], [0], [0], [1], [0, 0, 1, 1], [], []>} : vector<8x73xbf16>, vector<73x256xbf16>, vector<8x256xf32> -> vector<8x256xf32>
    %164 = arith.negf %163 : vector<8x256xf32>
    %165 = math.exp %164 : vector<8x256xf32>
    %cst_169 = arith.constant 1.000000e+00 : f32
    %166 = vector.broadcast %cst_169 : f32 to vector<8x256xf32>
    %167 = arith.addf %166, %165 : vector<8x256xf32>
    %168 = arith.divf %166, %167 : vector<8x256xf32>
    %c0_170 = arith.constant 0 : index
    %c0_171 = arith.constant 0 : index
    %c0_172 = arith.constant 0 : index
    %169 = vector.load %arg6[%c0_170, %c0_171, %c0_172] : memref<1x8x256xf32, #tpu.memory_space<vmem>>, vector<1x8x256xf32>
    %170 = vector.shape_cast %169 : vector<1x8x256xf32> to vector<8x256xf32>
    %171 = vector.shape_cast %168 : vector<8x256xf32> to vector<1x8x256xf32>
    tpu.vector_store %arg6[%c0_170, %c0_171, %c0_172], %171 {strides = array<i32>} : memref<1x8x256xf32, #tpu.memory_space<vmem>>, vector<1x8x256xf32>,
    return
  }
  func.func @transform_0(%arg0: i32) -> (i32, i32, i32) {
    %c0_i32 = arith.constant 0 : i32
    %c0_i32_0 = arith.constant 0 : i32
    %c0_i32_1 = arith.constant 0 : i32
    return %arg0, %c0_i32, %c0_i32_0 : i32, i32, i32
  }
  func.func @transform_1(%arg0: i32) -> (i32, i32) {
    %c0_i32 = arith.constant 0 : i32
    %c0_i32_0 = arith.constant 0 : i32
    %c0_i32_1 = arith.constant 0 : i32
    return %c0_i32, %c0_i32_0 : i32, i32
  }
  func.func @transform_2(%arg0: i32) -> (i32, i32) {
    %c0_i32 = arith.constant 0 : i32
    %c0_i32_0 = arith.constant 0 : i32
    %c0_i32_1 = arith.constant 0 : i32
    return %c0_i32, %c0_i32_0 : i32, i32
  }
  func.func @transform_3(%arg0: i32) -> (i32, i32) {
    %c0_i32 = arith.constant 0 : i32
    %c0_i32_0 = arith.constant 0 : i32
    %c0_i32_1 = arith.constant 0 : i32
    return %c0_i32, %c0_i32_0 : i32, i32
  }
  func.func @transform_4(%arg0: i32) -> (i32, i32) {
    %c0_i32 = arith.constant 0 : i32
    %c0_i32_0 = arith.constant 0 : i32
    %c0_i32_1 = arith.constant 0 : i32
    return %c0_i32, %c0_i32_0 : i32, i32
  }
  func.func @transform_5(%arg0: i32) -> (i32, i32, i32) {
    %c0_i32 = arith.constant 0 : i32
    %c0_i32_0 = arith.constant 0 : i32
    %c0_i32_1 = arith.constant 0 : i32
    return %arg0, %c0_i32, %c0_i32_0 : i32, i32, i32
  }
}

</mosaic_0001>

<llo_original>
// kernel: tpu_custom_call.1
$region0: #{tpu_custom_call.1}
  #allocation0 [shape = 'u32[]', space=smem, size = 0x4, offset = 0x4, fixed_abs, tag = 'smem constant byte address 0x4 - core index']
  #allocation1 [shape = 'u32[144,128]{1,0:T(1,128)}', space=vmem, size = 0x12000, scoped, tag = 'internal scratch']
  #allocation2 [shape = 'f32[8,512]{1,0:T(8,128)}', space=vmem, size = 0x4000, scoped, tag = 'scratch operand']
  #allocation3 [shape = 'f32[73,256]{1,0:T(8,128)}', space=vmem, size = 0x14000, scoped, tag = 'scratch operand']
  %s0 = inlined_call_operand.hbm [shape: f32[2,4,256], index: 0, kind: input, shape index: {}]
  %s1 = inlined_call_operand.hbm [shape: f32[9,256], index: 1, kind: input, shape index: {}]
  %s2 = inlined_call_operand.vmem [shape: bf16[8,37], index: 2, kind: input, shape index: {}]
  %s3 = inlined_call_operand.vmem [shape: bf16[8,73], index: 3, kind: input, shape index: {}]
  %s4 = inlined_call_operand.vmem [shape: bf16[8,73], index: 4, kind: input, shape index: {}]
  %s5 = inlined_call_operand.hbm [shape: f32[2,8,256], index: 5, kind: output, shape index: {}]
  %s6 = sld [smem:[#allocation0]]
  $region61: #{tpu_custom_call.1} parent=0
    _
  %s8 = ssub.s32 1, %s6
  %s9 = scalar_select 0, %s8, %s6
  $region1: #{tpu_custom_call.1} parent=0
    #allocation4 [shape = 'u8[8192]{0}', space=vmem, size = 0x2000, scoped, tag = 'input window, operand 0']
    #allocation5 [shape = 's32[2]{0}', space=sflag, size = 0x8, scoped, tag = 'scoped memory for tpu_custom_call.1']
    #allocation6 [shape = 's32[2]{0}', space=sflag, size = 0x8, scoped, tag = 'scoped memory for tpu_custom_call.1']
    #allocation7 [shape = 'u8[16384]{0}', space=vmem, size = 0x4000, scoped, tag = 'input window, operand 1, single buffered']
    #allocation8 [shape = 's32[1]{0}', space=sflag, size = 0x4, scoped, tag = 'scoped memory for tpu_custom_call.1']
    #allocation9 [shape = 'u8[16384]{0}', space=vmem, size = 0x4000, scoped, tag = 'output window, operand 0']
    %10 = vsyncpa [#allocation5], 0
    %s11 = scalar_lea.sflag [#allocation5], 1
    %12 = vsyncpa %s11, 0
    %13 = vsyncpa [#allocation8], 0
    %14 = vsyncpa [#allocation6], 0
    %s15 = scalar_lea.sflag [#allocation6], 1
    %16 = vsyncpa %s15, 0
    loop: start=0, step=1, limit=4
    $region2: #{tpu_custom_call.1} parent=1 // loop_pre_header
      _
    $region3: #{tpu_custom_call.1} parent=1 // loop_header
      %s18 = sphi 0, %s22
      %p19 = scmp.ge.s32.totalorder %s18, 4
      %s28 = sphi 0, %s30
      %s31 = sphi 0, %s28
      %s32 = sphi 0, %s31
      %s48 = sphi 0, %s32
      %s52 = sphi 0, %s52
      %s54 = sphi 0, %s52
      %s55 = sphi 0, %s54
      %s69 = sphi 0, %s55
      %s73 = sphi 0, %s73
      %s75 = sphi 0, %s73
      %s76 = sphi 0, %s75
      %s90 = sphi 0, %s76
      %s94 = sphi 0, %s94
      %s96 = sphi 0, %s94
      %s97 = sphi 0, %s96
      %s111 = sphi 0, %s97
      %s115 = sphi 0, %s115
      %s117 = sphi 0, %s115
      %s118 = sphi 0, %s117
      %s132 = sphi 0, %s118
      %s138 = sphi 0, %s140
      %s141 = sphi 0, %s138
      %s142 = sphi 0, %s141
      %s158 = sphi 0, %s142
    $region4: #{tpu_custom_call.1} parent=1 // loop_header_branch
      %21 = sbr.rel (%p19) target = $region8
    $region5: #{tpu_custom_call.1} parent=1 // loop_body
      %s23 = ssub.s32 %s18, 1
      %s24 = ssub.s32 %s18, 2
      %s25 = sadd.s32 %s18, 1
      %s26 = ssub.s32 %s18, %s25
      %p27 = scmp.eq.s32.totalorder %s26, 0
      %s29 = sadd.s32 %s28, 1
      %s30 = scalar_select %p27, %s28, %s29
      %p33 = pneg %p27
      %p34 = scmp.eq.s32.totalorder %s18, 1
      %p35 = por %p33, %p34
      %p36 = scmp.ne.s32.totalorder %s28, %s31
      %p37 = scmp.eq.s32.totalorder %s18, 0
      %p38 = por %p36, %p37
      %p39 = scmp.ne.s32.totalorder %s28, %s31
      %p40 = scmp.eq.s32.totalorder %s23, 1
      %p41 = por %p39, %p40
      %p42 = scmp.ne.s32.totalorder %s31, %s32
      %p43 = scmp.eq.s32.totalorder %s23, 0
      %p44 = por %p42, %p43
      %p45 = scmp.ne.s32.totalorder %s31, %s32
      %p46 = scmp.eq.s32.totalorder %s24, 1
      %p47 = por %p45, %p46
      %p49 = scmp.ne.s32.totalorder %s32, %s48
      %p50 = scmp.eq.s32.totalorder %s24, 0
      %p51 = por %p49, %p50
      %s53 = sadd.s32 %s52, 1
      %p56 = scmp.eq.s32.totalorder %s18, 1
      %p57 = scmp.ne.s32.totalorder %s52, %s54
      %p58 = scmp.eq.s32.totalorder %s18, 0
      %p59 = por %p57, %p58
      %p60 = scmp.ne.s32.totalorder %s52, %s54
      %p61 = scmp.eq.s32.totalorder %s23, 1
      %p62 = por %p60, %p61
      %p63 = scmp.ne.s32.totalorder %s54, %s55
      %p64 = scmp.eq.s32.totalorder %s23, 0
      %p65 = por %p63, %p64
      %p66 = scmp.ne.s32.totalorder %s54, %s55
      %p67 = scmp.eq.s32.totalorder %s24, 1
      %p68 = por %p66, %p67
      %p70 = scmp.ne.s32.totalorder %s55, %s69
      %p71 = scmp.eq.s32.totalorder %s24, 0
      %p72 = por %p70, %p71
      %s74 = sadd.s32 %s73, 1
      %p77 = scmp.eq.s32.totalorder %s18, 1
      %p78 = scmp.ne.s32.totalorder %s73, %s75
      %p79 = scmp.eq.s32.totalorder %s18, 0
      %p80 = por %p78, %p79
      %p81 = scmp.ne.s32.totalorder %s73, %s75
      %p82 = scmp.eq.s32.totalorder %s23, 1
      %p83 = por %p81, %p82
      %p84 = scmp.ne.s32.totalorder %s75, %s76
      %p85 = scmp.eq.s32.totalorder %s23, 0
      %p86 = por %p84, %p85
      %p87 = scmp.ne.s32.totalorder %s75, %s76
      %p88 = scmp.eq.s32.totalorder %s24, 1
      %p89 = por %p87, %p88
      %p91 = scmp.ne.s32.totalorder %s76, %s90
      %p92 = scmp.eq.s32.totalorder %s24, 0
      %p93 = por %p91, %p92
      %s95 = sadd.s32 %s94, 1
      %p98 = scmp.eq.s32.totalorder %s18, 1
      %p99 = scmp.ne.s32.totalorder %s94, %s96
      %p100 = scmp.eq.s32.totalorder %s18, 0
      %p101 = por %p99, %p100
      %p102 = scmp.ne.s32.totalorder %s94, %s96
      %p103 = scmp.eq.s32.totalorder %s23, 1
      %p104 = por %p102, %p103
      %p105 = scmp.ne.s32.totalorder %s96, %s97
      %p106 = scmp.eq.s32.totalorder %s23, 0
      %p107 = por %p105, %p106
      %p108 = scmp.ne.s32.totalorder %s96, %s97
      %p109 = scmp.eq.s32.totalorder %s24, 1
      %p110 = por %p108, %p109
      %p112 = scmp.ne.s32.totalorder %s97, %s111
      %p113 = scmp.eq.s32.totalorder %s24, 0
      %p114 = por %p112, %p113
      %s116 = sadd.s32 %s115, 1
      %p119 = scmp.eq.s32.totalorder %s18, 1
      %p120 = scmp.ne.s32.totalorder %s115, %s117
      %p121 = scmp.eq.s32.totalorder %s18, 0
      %p122 = por %p120, %p121
      %p123 = scmp.ne.s32.totalorder %s115, %s117
      %p124 = scmp.eq.s32.totalorder %s23, 1
      %p125 = por %p123, %p124
      %p126 = scmp.ne.s32.totalorder %s117, %s118
      %p127 = scmp.eq.s32.totalorder %s23, 0
      %p128 = por %p126, %p127
      %p129 = scmp.ne.s32.totalorder %s117, %s118
      %p130 = scmp.eq.s32.totalorder %s24, 1
      %p131 = por %p129, %p130
      %p133 = scmp.ne.s32.totalorder %s118, %s132
      %p134 = scmp.eq.s32.totalorder %s24, 0
      %p135 = por %p133, %p134
      %s136 = ssub.s32 %s18, %s25
      %p137 = scmp.eq.s32.totalorder %s136, 0
      %s139 = sadd.s32 %s138, 1
      %s140 = scalar_select %p137, %s138, %s139
      %p143 = pneg %p137
      %p144 = scmp.eq.s32.totalorder %s18, 1
      %p145 = por %p143, %p144
      %p146 = scmp.ne.s32.totalorder %s138, %s141
      %p147 = scmp.eq.s32.totalorder %s18, 0
      %p148 = por %p146, %p147
      %p149 = scmp.ne.s32.totalorder %s138, %s141
      %p150 = scmp.eq.s32.totalorder %s23, 1
      %p151 = por %p149, %p150
      %p152 = scmp.ne.s32.totalorder %s141, %s142
      %p153 = scmp.eq.s32.totalorder %s23, 0
      %p154 = por %p152, %p153
      %p155 = scmp.ne.s32.totalorder %s141, %s142
      %p156 = scmp.eq.s32.totalorder %s24, 1
      %p157 = por %p155, %p156
      %p159 = scmp.ne.s32.totalorder %s142, %s158
      %p160 = scmp.eq.s32.totalorder %s24, 0
      %p161 = por %p159, %p160
      %p162 = scmp.le.s32.totalorder 1, %s18
      %p163 = scmp.lt.s32.totalorder %s18, 3
      %p164 = pnand %p162, %p163
      %p165 = pneg %p164
      // Predicated region
      $region9: #{tpu_custom_call.1} parent=5 // pred_check
        _
      $region10: #{tpu_custom_call.1} parent=5 // pred_check_branch
        %167 = sbr.rel (%p164) target = $region12
      $region11: #{tpu_custom_call.1} parent=5 // pred_region
        %s168 = ssub.s32 %s18, 1
        // Predicated region
        $region13: #{tpu_custom_call.1} parent=11 // pred_check
          %p169 = pneg %p65
        $region14: #{tpu_custom_call.1} parent=11 // pred_check_branch
          %171 = sbr.rel (%p169) target = $region16
        $region15: #{tpu_custom_call.1} parent=11 // pred_region
          %s173 = ssub.s32 512, 512
          %174 = vsyncadd [#allocation8], %s173
          %s175 = sshll.u32 [#allocation7], 4
          %s176 = int_to_ptr.vmem [resolvable:$true] %s175
          %181 = dma.hbm_to_vmem [thread:$0]  %s1, 512, %s176, [#allocation8], 256, 256, 16
        $region16: #{tpu_custom_call.1} parent=11 // pred_fallthru
          _
        // Predicated region
        $region17: #{tpu_custom_call.1} parent=11 // pred_check
          %p182 = pneg %p86
        $region18: #{tpu_custom_call.1} parent=11 // pred_check_branch
          %184 = sbr.rel (%p182) target = $region20
        $region19: #{tpu_custom_call.1} parent=11 // pred_region
          _
        $region20: #{tpu_custom_call.1} parent=11 // pred_fallthru
          _
        // Predicated region
        $region21: #{tpu_custom_call.1} parent=11 // pred_check
          %p185 = pneg %p107
        $region22: #{tpu_custom_call.1} parent=11 // pred_check_branch
          %187 = sbr.rel (%p185) target = $region24
        $region23: #{tpu_custom_call.1} parent=11 // pred_region
          _
        $region24: #{tpu_custom_call.1} parent=11 // pred_fallthru
          _
        // Predicated region
        $region25: #{tpu_custom_call.1} parent=11 // pred_check
          %p188 = pneg %p128
        $region26: #{tpu_custom_call.1} parent=11 // pred_check_branch
          %190 = sbr.rel (%p188) target = $region28
        $region27: #{tpu_custom_call.1} parent=11 // pred_region
          _
        $region28: #{tpu_custom_call.1} parent=11 // pred_fallthru
          _
      $region12: #{tpu_custom_call.1} parent=5 // pred_fallthru
        _
      %p191 = scmp.lt.s32.totalorder %s18, 2
      // Predicated region
      $region29: #{tpu_custom_call.1} parent=5 // pred_check
        %p192 = pneg %p191
      $region30: #{tpu_custom_call.1} parent=5 // pred_check_branch
        %194 = sbr.rel (%p192) target = $region32
      $region31: #{tpu_custom_call.1} parent=5 // pred_region
        // Predicated region
        $region33: #{tpu_custom_call.1} parent=31 // pred_check
          %p195 = pneg %p38
        $region34: #{tpu_custom_call.1} parent=31 // pred_check_branch
          %197 = sbr.rel (%p195) target = $region36
        $region35: #{tpu_custom_call.1} parent=31 // pred_region
          %s198 = sand.u32 %s28, 1
          %s199 = scalar_lea.sflag [#allocation5], %s198
          %s200 = sand.u32 %s28, 1
          %s201 = smul.addr %s200, 8
          %s202 = scalar_lea.vmem [#allocation4], %s201
          %s204 = ssub.s32 128, 128
          %205 = vsyncadd %s199, %s204
          %s206 = smul.addr %s18, 2
          %s207 = smul.addr %s206, 64
          %s208 = scalar_lea.hbm %s0, %s207
          %s210 = sshll.u32 %s202, 4
          %s211 = int_to_ptr.vmem [resolvable:$true] %s210
          %213 = dma.hbm_to_vmem [thread:$0]  %s208, 128, %s211, %s199
        $region36: #{tpu_custom_call.1} parent=31 // pred_fallthru
          _
      $region32: #{tpu_custom_call.1} parent=5 // pred_fallthru
        _
      %p214 = scmp.le.s32.totalorder 1, %s18
      %p215 = scmp.lt.s32.totalorder %s18, 3
      %p216 = pnand %p214, %p215
      %p217 = pneg %p216
      // Predicated region
      $region37: #{tpu_custom_call.1} parent=5 // pred_check
        _
      $region38: #{tpu_custom_call.1} parent=5 // pred_check_branch
        %219 = sbr.rel (%p216) target = $region40
      $region39: #{tpu_custom_call.1} parent=5 // pred_region
        %s220 = ssub.s32 %s18, 1
        %s221 = sand.u32 %s31, 1
        %s222 = scalar_lea.sflag [#allocation5], %s221
        %s223 = sand.u32 %s31, 1
        %s224 = smul.addr %s223, 8
        %s225 = scalar_lea.vmem [#allocation4], %s224
        // Predicated region
        $region41: #{tpu_custom_call.1} parent=39 // pred_check
          %p226 = pneg %p44
        $region42: #{tpu_custom_call.1} parent=39 // pred_check_branch
          %228 = sbr.rel (%p226) target = $region44
        $region43: #{tpu_custom_call.1} parent=39 // pred_region
          %229 = dma.done %s222, 128
        $region44: #{tpu_custom_call.1} parent=39 // pred_fallthru
          _
        // Predicated region
        $region45: #{tpu_custom_call.1} parent=39 // pred_check
          %p230 = pneg %p65
        $region46: #{tpu_custom_call.1} parent=39 // pred_check_branch
          %232 = sbr.rel (%p230) target = $region48
        $region47: #{tpu_custom_call.1} parent=39 // pred_region
          %233 = dma.done [#allocation8], 512
        $region48: #{tpu_custom_call.1} parent=39 // pred_fallthru
          _
        %s234 = sand.u32 %s31, 1
        %s235 = scalar_lea.sflag [#allocation5], %s234
        %s236 = sand.u32 %s31, 1
        %s237 = smul.addr %s236, 8
        %s238 = scalar_lea.vmem [#allocation4], %s237
        %p239 = pneg %p44
        %p240 = pneg %p41
        %p241 = pneg %p65
        %p242 = pneg %p62
        %p243 = pneg %p86
        %p244 = pneg %p83
        %p245 = pneg %p107
        %p246 = pneg %p104
        %p247 = pneg %p128
        %p248 = pneg %p125
        %p249 = pneg %p154
        %p250 = pneg %p151
        %s251 = sand.u32 %s141, 1
        %s252 = scalar_lea.sflag [#allocation6], %s251
        %s253 = sand.u32 %s141, 1
        %s254 = smul.addr %s253, 16
        %s255 = scalar_lea.vmem [#allocation9], %s254
        %257 = vst [vmem:[#allocation2] sm:$0xff] 0.0
        %258 = vst [vmem:[#allocation2 + $0x8] sm:$0xff] 0.0
        %259 = vst [vmem:[#allocation2 + $0x10] sm:$0xff] 0.0
        %260 = vst [vmem:[#allocation2 + $0x18] sm:$0xff] 0.0
        %v261 = vld [vmem:[%s225] sm:$0xff]
        %v263 = vcombine.high %v261, %v261
        %265 = vst [vmem:[#allocation2 + $0x8] sm:$0xf] %v261
        %266 = vst [vmem:[#allocation2 + $0x10] sm:$0xf] %v263
        %v267 = vld [vmem:[#allocation2] sm:$0xf]
        %v268 = vld [vmem:[#allocation2 + $0x8] sm:$0xf]
        %v269 = vld [vmem:[#allocation2 + $0x10] sm:$0xf]
        %v270 = vld [vmem:[#allocation7] ss:$8 sm:$0x3]
        %v272 = vlaneseq
        %v273 = vshrl.u32 %v272, 7
        %v274 = vsub.s32 0, %v273
        %v275 = vrot.slane %v270, %v274
        %v276 = vlaneseq
        %v277 = vshrl.u32 %v276, 7
        %v278 = vsub.s32 1, %v277
        %v279 = vrot.slane %v270, %v278
        %280 = vrot.lane.b32.xlu0 %v275, 111
        %v281 = vpop.permute.xlu0 %280
        %282 = vrot.lane.b32.xlu0 %v279, 111
        %v283 = vpop.permute.xlu0 %282
        %vm284 = vcmask 908288
        %v285 = vsel %vm284, %v281, %v283
        %v289 = vmul.f32 %v267, %v281
        %v290 = vmul.f32 %v268, %v285
        %v291 = vmul.f32 %v269, %v283
        %295 = vrot.lane.b32.xlu0 %v289, 17
        %v296 = vpop.permute.xlu0 %295
        %297 = vrot.lane.b32.xlu0 %v290, 17
        %v298 = vpop.permute.xlu0 %297
        %299 = vrot.lane.b32.xlu0 %v291, 17
        %v300 = vpop.permute.xlu0 %299
        %vm301 = vcmask 138240
        %v302 = vsel %vm301, %v296, %v298
        %v303 = vsel %vm301, %v298, %v300
        %306 = vst [vmem:[#allocation3] sm:$0xf] %v302
        %307 = vst [vmem:[#allocation3 + $0x8] sm:$0xf] %v303
        %v308 = vld [vmem:[#allocation2] sm:$0xf]
        %v309 = vld [vmem:[#allocation2 + $0x8] sm:$0xf]
        %v310 = vld [vmem:[#allocation2 + $0x10] sm:$0xf]
        %s311 = scalar_lea.vmem [#allocation7], 1
        %v312 = vld [vmem:[%s311] ss:$8 sm:$0x3]
        %v314 = vlaneseq
        %v315 = vshrl.u32 %v314, 7
        %v316 = vsub.s32 0, %v315
        %v317 = vrot.slane %v312, %v316
        %v318 = vlaneseq
        %v319 = vshrl.u32 %v318, 7
        %v320 = vsub.s32 1, %v319
        %v321 = vrot.slane %v312, %v320
        %322 = vrot.lane.b32.xlu0 %v317, 112
        %v323 = vpop.permute.xlu0 %322
        %324 = vrot.lane.b32.xlu0 %v321, 112
        %v325 = vpop.permute.xlu0 %324
        %vm326 = vcmask 916480
        %v327 = vsel %vm326, %v323, %v325
        %v331 = vmul.f32 %v308, %v323
        %v332 = vmul.f32 %v309, %v327
        %v333 = vmul.f32 %v310, %v325
        %v337 = vrot.slane %v331, 4
        %v338 = vrot.slane %v332, 4
        %v339 = vrot.slane %v333, 4
        %340 = vrot.lane.b32.xlu0 %v337, 16
        %v341 = vpop.permute.xlu0 %340
        %342 = vrot.lane.b32.xlu0 %v338, 16
        %v343 = vpop.permute.xlu0 %342
        %344 = vrot.lane.b32.xlu0 %v339, 16
        %v345 = vpop.permute.xlu0 %344
        %vm346 = vcmask 130048
        %v347 = vsel %vm346, %v341, %v343
        %v348 = vsel %vm346, %v343, %v345
        %351 = vst [vmem:[#allocation3] sm:$0xf0] %v347
        %352 = vst [vmem:[#allocation3 + $0x8] sm:$0xf0] %v348
        %v353 = vld [vmem:[#allocation2] sm:$0xf]
        %v354 = vld [vmem:[#allocation2 + $0x8] sm:$0xf]
        %v355 = vld [vmem:[#allocation2 + $0x10] sm:$0xf]
        %s356 = scalar_lea.vmem [#allocation7], 2
        %v357 = vld [vmem:[%s356] ss:$8 sm:$0x3]
        %v359 = vlaneseq
        %v360 = vshrl.u32 %v359, 7
        %v361 = vsub.s32 0, %v360
        %v362 = vrot.slane %v357, %v361
        %v363 = vlaneseq
        %v364 = vshrl.u32 %v363, 7
        %v365 = vsub.s32 1, %v364
        %v366 = vrot.slane %v357, %v365
        %367 = vrot.lane.b32.xlu0 %v362, 113
        %v368 = vpop.permute.xlu0 %367
        %369 = vrot.lane.b32.xlu0 %v366, 113
        %v370 = vpop.permute.xlu0 %369
        %vm371 = vcmask 924672
        %v372 = vsel %vm371, %v368, %v370
        %v376 = vmul.f32 %v353, %v368
        %v377 = vmul.f32 %v354, %v372
        %v378 = vmul.f32 %v355, %v370
        %382 = vrot.lane.b32.xlu0 %v376, 15
        %v383 = vpop.permute.xlu0 %382
        %384 = vrot.lane.b32.xlu0 %v377, 15
        %v385 = vpop.permute.xlu0 %384
        %386 = vrot.lane.b32.xlu0 %v378, 15
        %v387 = vpop.permute.xlu0 %386
        %vm388 = vcmask 121856
        %v389 = vsel %vm388, %v383, %v385
        %v390 = vsel %vm388, %v385, %v387
        %393 = vst [vmem:[#allocation3 + $0x10] sm:$0xf] %v389
        %394 = vst [vmem:[#allocation3 + $0x18] sm:$0xf] %v390
        %v395 = vld [vmem:[#allocation2] sm:$0xf]
        %v396 = vld [vmem:[#allocation2 + $0x8] sm:$0xf]
        %v397 = vld [vmem:[#allocation2 + $0x10] sm:$0xf]
        %s398 = scalar_lea.vmem [#allocation7], 3
        %v399 = vld [vmem:[%s398] ss:$8 sm:$0x3]
        %v401 = vlaneseq
        %v402 = vshrl.u32 %v401, 7
        %v403 = vsub.s32 0, %v402
        %v404 = vrot.slane %v399, %v403
        %v405 = vlaneseq
        %v406 = vshrl.u32 %v405, 7
        %v407 = vsub.s32 1, %v406
        %v408 = vrot.slane %v399, %v407
        %409 = vrot.lane.b32.xlu0 %v404, 127
        %v410 = vpop.permute.xlu0 %409
        %411 = vrot.lane.b32.xlu0 %v408, 127
        %v412 = vpop.permute.xlu0 %411
        %vm413 = vcmask 1039360
        %v414 = vsel %vm413, %v410, %v412
        %v418 = vmul.f32 %v395, %v410
        %v419 = vmul.f32 %v396, %v414
        %v420 = vmul.f32 %v397, %v412
        %v424 = vrot.slane %v418, 4
        %v425 = vrot.slane %v419, 4
        %v426 = vrot.slane %v420, 4
        %427 = vrot.lane.b32.xlu0 %v424, 1
        %v428 = vpop.permute.xlu0 %427
        %429 = vrot.lane.b32.xlu0 %v425, 1
        %v430 = vpop.permute.xlu0 %429
        %431 = vrot.lane.b32.xlu0 %v426, 1
        %v432 = vpop.permute.xlu0 %431
        %vm433 = vcmask 7168
        %v434 = vsel %vm433, %v428, %v430
        %v435 = vsel %vm433, %v430, %v432
        %438 = vst [vmem:[#allocation3 + $0x10] sm:$0xf0] %v434
        %439 = vst [vmem:[#allocation3 + $0x18] sm:$0xf0] %v435
        %v440 = vld [vmem:[#allocation2 + $0x8] sm:$0xf]
        %v441 = vld [vmem:[#allocation2 + $0x10] sm:$0xf]
        %s442 = scalar_lea.vmem [#allocation7], 4
        %v443 = vld [vmem:[%s442] ss:$8 sm:$0x3]
        %v445 = vlaneseq
        %v446 = vshrl.u32 %v445, 7
        %v447 = vsub.s32 0, %v446
        %v448 = vrot.slane %v443, %v447
        %v449 = vlaneseq
        %v450 = vshrl.u32 %v449, 7
        %v451 = vsub.s32 1, %v450
        %v452 = vrot.slane %v443, %v451
        %v455 = vmul.f32 %v440, %v448
        %v456 = vmul.f32 %v441, %v452
        %457 = vst [vmem:[#allocation3 + $0x20] sm:$0xf] %v455
        %458 = vst [vmem:[#allocation3 + $0x28] sm:$0xf] %v456
        %v459 = vld [vmem:[#allocation2 + $0x8] sm:$0xf]
        %v460 = vld [vmem:[#allocation2 + $0x10] sm:$0xf]
        %v461 = vld [vmem:[#allocation2 + $0x18] sm:$0xf]
        %s462 = scalar_lea.vmem [#allocation7], 5
        %v463 = vld [vmem:[%s462] ss:$8 sm:$0x3]
        %v465 = vlaneseq
        %v466 = vshrl.u32 %v465, 7
        %v467 = vsub.s32 0, %v466
        %v468 = vrot.slane %v463, %v467
        %v469 = vlaneseq
        %v470 = vshrl.u32 %v469, 7
        %v471 = vsub.s32 1, %v470
        %v472 = vrot.slane %v463, %v471
        %473 = vrot.lane.b32.xlu0 %v468, 1
        %v474 = vpop.permute.xlu0 %473
        %475 = vrot.lane.b32.xlu0 %v472, 1
        %v476 = vpop.permute.xlu0 %475
        %v477 = vsel %vm433, %v474, %v476
        %v481 = vmul.f32 %v459, %v474
        %v482 = vmul.f32 %v460, %v477
        %v483 = vmul.f32 %v461, %v476
        %v487 = vrot.slane %v481, 4
        %v488 = vrot.slane %v482, 4
        %v489 = vrot.slane %v483, 4
        %490 = vrot.lane.b32.xlu0 %v487, 127
        %v491 = vpop.permute.xlu0 %490
        %492 = vrot.lane.b32.xlu0 %v488, 127
        %v493 = vpop.permute.xlu0 %492
        %494 = vrot.lane.b32.xlu0 %v489, 127
        %v495 = vpop.permute.xlu0 %494
        %v496 = vsel %vm413, %v491, %v493
        %v497 = vsel %vm413, %v493, %v495
        %500 = vst [vmem:[#allocation3 + $0x20] sm:$0xf0] %v496
        %501 = vst [vmem:[#allocation3 + $0x28] sm:$0xf0] %v497
        %v502 = vld [vmem:[#allocation2 + $0x8] sm:$0xf]
        %v503 = vld [vmem:[#allocation2 + $0x10] sm:$0xf]
        %v504 = vld [vmem:[#allocation2 + $0x18] sm:$0xf]
        %s505 = scalar_lea.vmem [#allocation7], 6
        %v506 = vld [vmem:[%s505] ss:$8 sm:$0x3]
        %v508 = vlaneseq
        %v509 = vshrl.u32 %v508, 7
        %v510 = vsub.s32 0, %v509
        %v511 = vrot.slane %v506, %v510
        %v512 = vlaneseq
        %v513 = vshrl.u32 %v512, 7
        %v514 = vsub.s32 1, %v513
        %v515 = vrot.slane %v506, %v514
        %516 = vrot.lane.b32.xlu0 %v511, 15
        %v517 = vpop.permute.xlu0 %516
        %518 = vrot.lane.b32.xlu0 %v515, 15
        %v519 = vpop.permute.xlu0 %518
        %v520 = vsel %vm388, %v517, %v519
        %v524 = vmul.f32 %v502, %v517
        %v525 = vmul.f32 %v503, %v520
        %v526 = vmul.f32 %v504, %v519
        %530 = vrot.lane.b32.xlu0 %v524, 113
        %v531 = vpop.permute.xlu0 %530
        %532 = vrot.lane.b32.xlu0 %v525, 113
        %v533 = vpop.permute.xlu0 %532
        %534 = vrot.lane.b32.xlu0 %v526, 113
        %v535 = vpop.permute.xlu0 %534
        %v536 = vsel %vm371, %v531, %v533
        %v537 = vsel %vm371, %v533, %v535
        %540 = vst [vmem:[#allocation3 + $0x30] sm:$0xf] %v536
        %541 = vst [vmem:[#allocation3 + $0x38] sm:$0xf] %v537
        %v542 = vld [vmem:[#allocation2 + $0x8] sm:$0xf]
        %v543 = vld [vmem:[#allocation2 + $0x10] sm:$0xf]
        %v544 = vld [vmem:[#allocation2 + $0x18] sm:$0xf]
        %s545 = scalar_lea.vmem [#allocation7], 7
        %v546 = vld [vmem:[%s545] ss:$8 sm:$0x3]
        %v548 = vlaneseq
        %v549 = vshrl.u32 %v548, 7
        %v550 = vsub.s32 0, %v549
        %v551 = vrot.slane %v546, %v550
        %v552 = vlaneseq
        %v553 = vshrl.u32 %v552, 7
        %v554 = vsub.s32 1, %v553
        %v555 = vrot.slane %v546, %v554
        %556 = vrot.lane.b32.xlu0 %v551, 16
        %v557 = vpop.permute.xlu0 %556
        %558 = vrot.lane.b32.xlu0 %v555, 16
        %v559 = vpop.permute.xlu0 %558
        %v560 = vsel %vm346, %v557, %v559
        %v564 = vmul.f32 %v542, %v557
        %v565 = vmul.f32 %v543, %v560
        %v566 = vmul.f32 %v544, %v559
        %v570 = vrot.slane %v564, 4
        %v571 = vrot.slane %v565, 4
        %v572 = vrot.slane %v566, 4
        %573 = vrot.lane.b32.xlu0 %v570, 112
        %v574 = vpop.permute.xlu0 %573
        %575 = vrot.lane.b32.xlu0 %v571, 112
        %v576 = vpop.permute.xlu0 %575
        %577 = vrot.lane.b32.xlu0 %v572, 112
        %v578 = vpop.permute.xlu0 %577
        %v579 = vsel %vm326, %v574, %v576
        %v580 = vsel %vm326, %v576, %v578
        %583 = vst [vmem:[#allocation3 + $0x30] sm:$0xf0] %v579
        %584 = vst [vmem:[#allocation3 + $0x38] sm:$0xf0] %v580
        %v585 = vld [vmem:[#allocation2 + $0x8] sm:$0xf]
        %v586 = vld [vmem:[#allocation2 + $0x10] sm:$0xf]
        %v587 = vld [vmem:[#allocation2 + $0x18] sm:$0xf]
        %s588 = scalar_lea.vmem [#allocation7], 16
        %v589 = vld [vmem:[%s588] ss:$8 sm:$0x3]
        %v591 = vlaneseq
        %v592 = vshrl.u32 %v591, 7
        %v593 = vsub.s32 0, %v592
        %v594 = vrot.slane %v589, %v593
        %v595 = vlaneseq
        %v596 = vshrl.u32 %v595, 7
        %v597 = vsub.s32 1, %v596
        %v598 = vrot.slane %v589, %v597
        %599 = vrot.lane.b32.xlu0 %v594, 17
        %v600 = vpop.permute.xlu0 %599
        %601 = vrot.lane.b32.xlu0 %v598, 17
        %v602 = vpop.permute.xlu0 %601
        %v603 = vsel %vm301, %v600, %v602
        %v607 = vmul.f32 %v585, %v600
        %v608 = vmul.f32 %v586, %v603
        %v609 = vmul.f32 %v587, %v602
        %613 = vrot.lane.b32.xlu0 %v607, 111
        %v614 = vpop.permute.xlu0 %613
        %615 = vrot.lane.b32.xlu0 %v608, 111
        %v616 = vpop.permute.xlu0 %615
        %617 = vrot.lane.b32.xlu0 %v609, 111
        %v618 = vpop.permute.xlu0 %617
        %v619 = vsel %vm284, %v614, %v616
        %v620 = vsel %vm284, %v616, %v618
        %623 = vst [vmem:[#allocation3 + $0x40] sm:$0xf] %v619
        %624 = vst [vmem:[#allocation3 + $0x48] sm:$0xf] %v620
        %v625 = vlaneseq
        %vm626 = vcmp.ge.s32.totalorder %v625, 0
        %vm627 = vcmp.lt.s32.totalorder %v625, 256
        %vm628 = vmand %vm626, %vm627
        %s629 = scalar_lea.vmem [#allocation3], 68
        %630 = vst.msk [vmem:[%s629] ss:$8 sm:$0x3] %vm628, 1.0
        %631 = vst.msk [vmem:[%s629] ss:$8 sm:$0x0] %vm628, 1.0
        %v632 = vld [vmem:[#allocation3] sm:$0xff]
        %v633 = vld [vmem:[#allocation3 + $0x8] sm:$0xff]
        %v634 = vld [vmem:[#allocation3 + $0x10] sm:$0xff]
        %v635 = vld [vmem:[#allocation3 + $0x18] sm:$0xff]
        %v636 = vld [vmem:[#allocation3 + $0x20] sm:$0xff]
        %v637 = vld [vmem:[#allocation3 + $0x28] sm:$0xff]
        %v638 = vld [vmem:[#allocation3 + $0x30] sm:$0xff]
        %v639 = vld [vmem:[#allocation3 + $0x38] sm:$0xff]
        %v640 = vld [vmem:[#allocation3 + $0x40] sm:$0x1f]
        %v641 = vld [vmem:[#allocation3 + $0x48] sm:$0x1f]
        %v642 = vpack.c.bf16 %v634, %v632
        %v643 = vpack.c.bf16 %v635, %v633
        %v644 = vpack.c.bf16 %v638, %v636
        %v645 = vpack.c.bf16 %v639, %v637
        %v646 = vpack.c.bf16 %v640, %v640
        %v647 = vpack.c.bf16 %v641, %v641
        %v648 = vld [vmem:[%s2] sm:$0xf]
        %vm649 = vcmask 302080
        %v651 = vsel %vm649, %v648, 0
        %vm653 = vcmask 1041408
        %vm654 = vcmask 1042432
        %v655 = vsel %vm653, 4294967295, 65535
        %v656 = vsel %vm654, %v655, 0
        %v658 = vand.u32 %v646, %v656
        %v661 = vand.u32 %v647, %v656
        %663 = vmatprep.subr.bf16.mxu0 %v643
        %664 = vmatpush1.bf16.msra.mxu0 %v642
        %665 = vmatprep.subr.bf16.mxu0 %v645
        %666 = vmatpush1.bf16.msra.mxu0 %v644
        %667 = vmatprep.subr.bf16.mxu0 %v661
        %668 = vmatpush1.bf16.msra.mxu0 %v658
        %669 = vmatprep.subr.bf16.mxu0 0
        %670 = vmatpush1.bf16.msra.mxu0 0
        %671 = vmatprep.subr.bf16.mxu0 0
        %672 = vmatpush1.bf16.msra.mxu0 0
        %673 = vmatprep.subr.bf16.mxu0 0
        %674 = vmatpush1.bf16.msra.mxu0 0
        %675 = vmatprep.subr.bf16.mxu0 0
        %676 = vmatpush1.bf16.msra.mxu0 0
        %677 = vmatprep.subr.bf16.mxu0 0
        %678 = vmatpush1.bf16.msra.mxu0 0
        %679 = vmatprep.subr.bf16.mxu0 0
        %680 = vmatpush1.bf16.msra.mxu0 0
        %681 = vmatprep.subr.bf16.mxu0 0
        %682 = vmatpush1.bf16.msra.mxu0 0
        %683 = vmatprep.subr.bf16.mxu0 0
        %684 = vmatpush1.bf16.msra.mxu0 0
        %685 = vmatprep.subr.bf16.mxu0 0
        %686 = vmatpush1.bf16.msra.mxu0 0
        %687 = vmatprep.subr.bf16.mxu0 0
        %688 = vmatpush1.bf16.msra.mxu0 0
        %689 = vmatprep.subr.bf16.mxu0 0
        %690 = vmatpush1.bf16.msra.mxu0 0
        %691 = vmatprep.subr.bf16.mxu0 0
        %692 = vmatpush1.bf16.msra.mxu0 0
        %693 = vmatprep.subr.bf16.mxu0 0
        %694 = vmatpush1.bf16.msra.mxu0 0
        %695 = vmatprep.mubr.bf16.mxu0 0
        %696 = vmatmul.mubr.bf16.gmra.mrb[0].mxu0 %v651
        %v697 = vpop.f32.mrb[0].mxu0
        %v698 = vadd.f32 0.0, %v697
        %v699 = vpop.f32.mrb[0].mxu0
        %v700 = vadd.f32 0.0, %v699
        %v701 = vpop.f32.mrb[0].mxu0
        %v702 = vpop.f32.mrb[0].mxu0
        %703 = vdwg.mxu0
        %v704 = vmax.f32 %v698, 0.0
        %v705 = vmax.f32 %v700, 0.0
        %706 = vst [vmem:[#allocation2 + $0x8] sm:$0xff] %v704
        %707 = vst [vmem:[#allocation2 + $0x10] sm:$0xff] %v705
        %v708 = vld [vmem:[#allocation2] sm:$0xff]
        %v709 = vld [vmem:[#allocation2 + $0x8] sm:$0xff]
        %v710 = vld [vmem:[#allocation2 + $0x10] sm:$0xff]
        %v711 = vld [vmem:[#allocation7] ss:$8 sm:$0x3]
        %v713 = vlaneseq
        %v714 = vshrl.u32 %v713, 7
        %v715 = vsub.s32 0, %v714
        %v716 = vrot.slane %v711, %v715
        %v717 = vlaneseq
        %v718 = vshrl.u32 %v717, 7
        %v719 = vsub.s32 1, %v718
        %v720 = vrot.slane %v711, %v719
        %721 = vrot.lane.b32.xlu0 %v716, 111
        %v722 = vpop.permute.xlu0 %721
        %723 = vrot.lane.b32.xlu0 %v720, 111
        %v724 = vpop.permute.xlu0 %723
        %v725 = vsel %vm284, %v722, %v724
        %v729 = vmul.f32 %v708, %v722
        %v730 = vmul.f32 %v709, %v725
        %v731 = vmul.f32 %v710, %v724
        %735 = vrot.lane.b32.xlu0 %v729, 17
        %v736 = vpop.permute.xlu0 %735
        %737 = vrot.lane.b32.xlu0 %v730, 17
        %v738 = vpop.permute.xlu0 %737
        %739 = vrot.lane.b32.xlu0 %v731, 17
        %v740 = vpop.permute.xlu0 %739
        %v741 = vsel %vm301, %v736, %v738
        %v742 = vsel %vm301, %v738, %v740
        %745 = vst [vmem:[#allocation3] sm:$0xff] %v741
        %746 = vst [vmem:[#allocation3 + $0x8] sm:$0xff] %v742
        %v747 = vld [vmem:[#allocation2] sm:$0xff]
        %v748 = vld [vmem:[#allocation2 + $0x8] sm:$0xff]
        %v749 = vld [vmem:[#allocation2 + $0x10] sm:$0xff]
        %v750 = vld [vmem:[%s311] ss:$8 sm:$0x3]
        %v752 = vlaneseq
        %v753 = vshrl.u32 %v752, 7
        %v754 = vsub.s32 0, %v753
        %v755 = vrot.slane %v750, %v754
        %v756 = vlaneseq
        %v757 = vshrl.u32 %v756, 7
        %v758 = vsub.s32 1, %v757
        %v759 = vrot.slane %v750, %v758
        %760 = vrot.lane.b32.xlu0 %v755, 112
        %v761 = vpop.permute.xlu0 %760
        %762 = vrot.lane.b32.xlu0 %v759, 112
        %v763 = vpop.permute.xlu0 %762
        %v764 = vsel %vm326, %v761, %v763
        %v768 = vmul.f32 %v747, %v761
        %v769 = vmul.f32 %v748, %v764
        %v770 = vmul.f32 %v749, %v763
        %774 = vrot.lane.b32.xlu0 %v768, 16
        %v775 = vpop.permute.xlu0 %774
        %776 = vrot.lane.b32.xlu0 %v769, 16
        %v777 = vpop.permute.xlu0 %776
        %778 = vrot.lane.b32.xlu0 %v770, 16
        %v779 = vpop.permute.xlu0 %778
        %v780 = vsel %vm346, %v775, %v777
        %v781 = vsel %vm346, %v777, %v779
        %784 = vst [vmem:[#allocation3 + $0x10] sm:$0xff] %v780
        %785 = vst [vmem:[#allocation3 + $0x18] sm:$0xff] %v781
        %v786 = vld [vmem:[#allocation2] sm:$0xff]
        %v787 = vld [vmem:[#allocation2 + $0x8] sm:$0xff]
        %v788 = vld [vmem:[#allocation2 + $0x10] sm:$0xff]
        %v789 = vld [vmem:[%s356] ss:$8 sm:$0x3]
        %v791 = vlaneseq
        %v792 = vshrl.u32 %v791, 7
        %v793 = vsub.s32 0, %v792
        %v794 = vrot.slane %v789, %v793
        %v795 = vlaneseq
        %v796 = vshrl.u32 %v795, 7
        %v797 = vsub.s32 1, %v796
        %v798 = vrot.slane %v789, %v797
        %799 = vrot.lane.b32.xlu0 %v794, 113
        %v800 = vpop.permute.xlu0 %799
        %801 = vrot.lane.b32.xlu0 %v798, 113
        %v802 = vpop.permute.xlu0 %801
        %v803 = vsel %vm371, %v800, %v802
        %v807 = vmul.f32 %v786, %v800
        %v808 = vmul.f32 %v787, %v803
        %v809 = vmul.f32 %v788, %v802
        %813 = vrot.lane.b32.xlu0 %v807, 15
        %v814 = vpop.permute.xlu0 %813
        %815 = vrot.lane.b32.xlu0 %v808, 15
        %v816 = vpop.permute.xlu0 %815
        %817 = vrot.lane.b32.xlu0 %v809, 15
        %v818 = vpop.permute.xlu0 %817
        %v819 = vsel %vm388, %v814, %v816
        %v820 = vsel %vm388, %v816, %v818
        %823 = vst [vmem:[#allocation3 + $0x20] sm:$0xff] %v819
        %824 = vst [vmem:[#allocation3 + $0x28] sm:$0xff] %v820
        %v825 = vld [vmem:[#allocation2] sm:$0xff]
        %v826 = vld [vmem:[#allocation2 + $0x8] sm:$0xff]
        %v827 = vld [vmem:[#allocation2 + $0x10] sm:$0xff]
        %v828 = vld [vmem:[%s398] ss:$8 sm:$0x3]
        %v830 = vlaneseq
        %v831 = vshrl.u32 %v830, 7
        %v832 = vsub.s32 0, %v831
        %v833 = vrot.slane %v828, %v832
        %v834 = vlaneseq
        %v835 = vshrl.u32 %v834, 7
        %v836 = vsub.s32 1, %v835
        %v837 = vrot.slane %v828, %v836
        %838 = vrot.lane.b32.xlu0 %v833, 127
        %v839 = vpop.permute.xlu0 %838
        %840 = vrot.lane.b32.xlu0 %v837, 127
        %v841 = vpop.permute.xlu0 %840
        %v842 = vsel %vm413, %v839, %v841
        %v846 = vmul.f32 %v825, %v839
        %v847 = vmul.f32 %v826, %v842
        %v848 = vmul.f32 %v827, %v841
        %852 = vrot.lane.b32.xlu0 %v846, 1
        %v853 = vpop.permute.xlu0 %852
        %854 = vrot.lane.b32.xlu0 %v847, 1
        %v855 = vpop.permute.xlu0 %854
        %856 = vrot.lane.b32.xlu0 %v848, 1
        %v857 = vpop.permute.xlu0 %856
        %v858 = vsel %vm433, %v853, %v855
        %v859 = vsel %vm433, %v855, %v857
        %862 = vst [vmem:[#allocation3 + $0x30] sm:$0xff] %v858
        %863 = vst [vmem:[#allocation3 + $0x38] sm:$0xff] %v859
        %v864 = vld [vmem:[#allocation2 + $0x8] sm:$0xff]
        %v865 = vld [vmem:[#allocation2 + $0x10] sm:$0xff]
        %v866 = vld [vmem:[%s442] ss:$8 sm:$0x3]
        %v868 = vlaneseq
        %v869 = vshrl.u32 %v868, 7
        %v870 = vsub.s32 0, %v869
        %v871 = vrot.slane %v866, %v870
        %v872 = vlaneseq
        %v873 = vshrl.u32 %v872, 7
        %v874 = vsub.s32 1, %v873
        %v875 = vrot.slane %v866, %v874
        %v878 = vmul.f32 %v864, %v871
        %v879 = vmul.f32 %v865, %v875
        %880 = vst [vmem:[#allocation3 + $0x40] sm:$0xff] %v878
        %881 = vst [vmem:[#allocation3 + $0x48] sm:$0xff] %v879
        %v882 = vld [vmem:[#allocation2 + $0x8] sm:$0xff]
        %v883 = vld [vmem:[#allocation2 + $0x10] sm:$0xff]
        %v884 = vld [vmem:[#allocation2 + $0x18] sm:$0xff]
        %v885 = vld [vmem:[%s462] ss:$8 sm:$0x3]
        %v887 = vlaneseq
        %v888 = vshrl.u32 %v887, 7
        %v889 = vsub.s32 0, %v888
        %v890 = vrot.slane %v885, %v889
        %v891 = vlaneseq
        %v892 = vshrl.u32 %v891, 7
        %v893 = vsub.s32 1, %v892
        %v894 = vrot.slane %v885, %v893
        %895 = vrot.lane.b32.xlu0 %v890, 1
        %v896 = vpop.permute.xlu0 %895
        %897 = vrot.lane.b32.xlu0 %v894, 1
        %v898 = vpop.permute.xlu0 %897
        %v899 = vsel %vm433, %v896, %v898
        %v903 = vmul.f32 %v882, %v896
        %v904 = vmul.f32 %v883, %v899
        %v905 = vmul.f32 %v884, %v898
        %909 = vrot.lane.b32.xlu0 %v903, 127
        %v910 = vpop.permute.xlu0 %909
        %911 = vrot.lane.b32.xlu0 %v904, 127
        %v912 = vpop.permute.xlu0 %911
        %913 = vrot.lane.b32.xlu0 %v905, 127
        %v914 = vpop.permute.xlu0 %913
        %v915 = vsel %vm413, %v910, %v912
        %v916 = vsel %vm413, %v912, %v914
        %919 = vst [vmem:[#allocation3 + $0x50] sm:$0xff] %v915
        %920 = vst [vmem:[#allocation3 + $0x58] sm:$0xff] %v916
        %v921 = vld [vmem:[#allocation2 + $0x8] sm:$0xff]
        %v922 = vld [vmem:[#allocation2 + $0x10] sm:$0xff]
        %v923 = vld [vmem:[#allocation2 + $0x18] sm:$0xff]
        %v924 = vld [vmem:[%s505] ss:$8 sm:$0x3]
        %v926 = vlaneseq
        %v927 = vshrl.u32 %v926, 7
        %v928 = vsub.s32 0, %v927
        %v929 = vrot.slane %v924, %v928
        %v930 = vlaneseq
        %v931 = vshrl.u32 %v930, 7
        %v932 = vsub.s32 1, %v931
        %v933 = vrot.slane %v924, %v932
        %934 = vrot.lane.b32.xlu0 %v929, 15
        %v935 = vpop.permute.xlu0 %934
        %936 = vrot.lane.b32.xlu0 %v933, 15
        %v937 = vpop.permute.xlu0 %936
        %v938 = vsel %vm388, %v935, %v937
        %v942 = vmul.f32 %v921, %v935
        %v943 = vmul.f32 %v922, %v938
        %v944 = vmul.f32 %v923, %v937
        %948 = vrot.lane.b32.xlu0 %v942, 113
        %v949 = vpop.permute.xlu0 %948
        %950 = vrot.lane.b32.xlu0 %v943, 113
        %v951 = vpop.permute.xlu0 %950
        %952 = vrot.lane.b32.xlu0 %v944, 113
        %v953 = vpop.permute.xlu0 %952
        %v954 = vsel %vm371, %v949, %v951
        %v955 = vsel %vm371, %v951, %v953
        %958 = vst [vmem:[#allocation3 + $0x60] sm:$0xff] %v954
        %959 = vst [vmem:[#allocation3 + $0x68] sm:$0xff] %v955
        %v960 = vld [vmem:[#allocation2 + $0x8] sm:$0xff]
        %v961 = vld [vmem:[#allocation2 + $0x10] sm:$0xff]
        %v962 = vld [vmem:[#allocation2 + $0x18] sm:$0xff]
        %v963 = vld [vmem:[%s545] ss:$8 sm:$0x3]
        %v965 = vlaneseq
        %v966 = vshrl.u32 %v965, 7
        %v967 = vsub.s32 0, %v966
        %v968 = vrot.slane %v963, %v967
        %v969 = vlaneseq
        %v970 = vshrl.u32 %v969, 7
        %v971 = vsub.s32 1, %v970
        %v972 = vrot.slane %v963, %v971
        %973 = vrot.lane.b32.xlu0 %v968, 16
        %v974 = vpop.permute.xlu0 %973
        %975 = vrot.lane.b32.xlu0 %v972, 16
        %v976 = vpop.permute.xlu0 %975
        %v977 = vsel %vm346, %v974, %v976
        %v981 = vmul.f32 %v960, %v974
        %v982 = vmul.f32 %v961, %v977
        %v983 = vmul.f32 %v962, %v976
        %987 = vrot.lane.b32.xlu0 %v981, 112
        %v988 = vpop.permute.xlu0 %987
        %989 = vrot.lane.b32.xlu0 %v982, 112
        %v990 = vpop.permute.xlu0 %989
        %991 = vrot.lane.b32.xlu0 %v983, 112
        %v992 = vpop.permute.xlu0 %991
        %v993 = vsel %vm326, %v988, %v990
        %v994 = vsel %vm326, %v990, %v992
        %997 = vst [vmem:[#allocation3 + $0x70] sm:$0xff] %v993
        %998 = vst [vmem:[#allocation3 + $0x78] sm:$0xff] %v994
        %v999 = vld [vmem:[#allocation2 + $0x8] sm:$0xff]
        %v1000 = vld [vmem:[#allocation2 + $0x10] sm:$0xff]
        %v1001 = vld [vmem:[#allocation2 + $0x18] sm:$0xff]
        %v1002 = vld [vmem:[%s588] ss:$8 sm:$0x3]
        %v1004 = vlaneseq
        %v1005 = vshrl.u32 %v1004, 7
        %v1006 = vsub.s32 0, %v1005
        %v1007 = vrot.slane %v1002, %v1006
        %v1008 = vlaneseq
        %v1009 = vshrl.u32 %v1008, 7
        %v1010 = vsub.s32 1, %v1009
        %v1011 = vrot.slane %v1002, %v1010
        %1012 = vrot.lane.b32.xlu0 %v1007, 17
        %v1013 = vpop.permute.xlu0 %1012
        %1014 = vrot.lane.b32.xlu0 %v1011, 17
        %v1015 = vpop.permute.xlu0 %1014
        %v1016 = vsel %vm301, %v1013, %v1015
        %v1020 = vmul.f32 %v999, %v1013
        %v1021 = vmul.f32 %v1000, %v1016
        %v1022 = vmul.f32 %v1001, %v1015
        %1026 = vrot.lane.b32.xlu0 %v1020, 111
        %v1027 = vpop.permute.xlu0 %1026
        %1028 = vrot.lane.b32.xlu0 %v1021, 111
        %v1029 = vpop.permute.xlu0 %1028
        %1030 = vrot.lane.b32.xlu0 %v1022, 111
        %v1031 = vpop.permute.xlu0 %1030
        %v1032 = vsel %vm284, %v1027, %v1029
        %v1033 = vsel %vm284, %v1029, %v1031
        %1036 = vst [vmem:[#allocation3 + $0x80] sm:$0xff] %v1032
        %1037 = vst [vmem:[#allocation3 + $0x88] sm:$0xff] %v1033
        %s1038 = scalar_lea.vmem [#allocation3], 144
        %1039 = vst.msk [vmem:[%s1038] ss:$8 sm:$0x3] %vm628, 1.0
        %1040 = vst.msk [vmem:[%s1038] ss:$8 sm:$0x0] %vm628, 1.0
        %v1041 = vld [vmem:[#allocation3] sm:$0xff]
        %v1042 = vld [vmem:[#allocation3 + $0x8] sm:$0xff]
        %v1043 = vld [vmem:[#allocation3 + $0x10] sm:$0xff]
        %v1044 = vld [vmem:[#allocation3 + $0x18] sm:$0xff]
        %v1045 = vld [vmem:[#allocation3 + $0x20] sm:$0xff]
        %v1046 = vld [vmem:[#allocation3 + $0x28] sm:$0xff]
        %v1047 = vld [vmem:[#allocation3 + $0x30] sm:$0xff]
        %v1048 = vld [vmem:[#allocation3 + $0x38] sm:$0xff]
        %v1049 = vld [vmem:[#allocation3 + $0x40] sm:$0xff]
        %v1050 = vld [vmem:[#allocation3 + $0x48] sm:$0xff]
        %v1051 = vld [vmem:[#allocation3 + $0x50] sm:$0xff]
        %v1052 = vld [vmem:[#allocation3 + $0x58] sm:$0xff]
        %v1053 = vld [vmem:[#allocation3 + $0x60] sm:$0xff]
        %v1054 = vld [vmem:[#allocation3 + $0x68] sm:$0xff]
        %v1055 = vld [vmem:[#allocation3 + $0x70] sm:$0xff]
        %v1056 = vld [vmem:[#allocation3 + $0x78] sm:$0xff]
        %v1057 = vld [vmem:[#allocation3 + $0x80] sm:$0xff]
        %v1058 = vld [vmem:[#allocation3 + $0x88] sm:$0xff]
        %v1059 = vld [vmem:[#allocation3 + $0x90] sm:$0x1]
        %v1060 = vld [vmem:[#allocation3 + $0x98] sm:$0x1]
        %v1061 = vpack.c.bf16 %v1043, %v1041
        %v1062 = vpack.c.bf16 %v1044, %v1042
        %v1063 = vpack.c.bf16 %v1047, %v1045
        %v1064 = vpack.c.bf16 %v1048, %v1046
        %v1065 = vpack.c.bf16 %v1051, %v1049
        %v1066 = vpack.c.bf16 %v1052, %v1050
        %v1067 = vpack.c.bf16 %v1055, %v1053
        %v1068 = vpack.c.bf16 %v1056, %v1054
        %v1069 = vpack.c.bf16 %v1059, %v1057
        %v1070 = vpack.c.bf16 %v1060, %v1058
        %v1071 = vld [vmem:[%s3] sm:$0xf]
        %vm1072 = vcmask 596992
        %v1074 = vsel %vm1072, %v1071, 0
        %vm1076 = vcmask 1043456
        %vm1077 = vcmask 1044480
        %v1078 = vsel %vm1076, 4294967295, 65535
        %v1079 = vsel %vm1077, %v1078, 0
        %v1081 = vand.u32 %v1069, %v1079
        %v1084 = vand.u32 %v1070, %v1079
        %1086 = vmatprep.subr.bf16.mxu0 %v1062
        %1087 = vmatpush1.bf16.msra.mxu0 %v1061
        %1088 = vmatprep.subr.bf16.mxu0 %v1064
        %1089 = vmatpush1.bf16.msra.mxu0 %v1063
        %1090 = vmatprep.subr.bf16.mxu0 %v1066
        %1091 = vmatpush1.bf16.msra.mxu0 %v1065
        %1092 = vmatprep.subr.bf16.mxu0 %v1068
        %1093 = vmatpush1.bf16.msra.mxu0 %v1067
        %1094 = vmatprep.subr.bf16.mxu0 %v1084
        %1095 = vmatpush1.bf16.msra.mxu0 %v1081
        %1096 = vmatprep.subr.bf16.mxu0 0
        %1097 = vmatpush1.bf16.msra.mxu0 0
        %1098 = vmatprep.subr.bf16.mxu0 0
        %1099 = vmatpush1.bf16.msra.mxu0 0
        %1100 = vmatprep.subr.bf16.mxu0 0
        %1101 = vmatpush1.bf16.msra.mxu0 0
        %1102 = vmatprep.subr.bf16.mxu0 0
        %1103 = vmatpush1.bf16.msra.mxu0 0
        %1104 = vmatprep.subr.bf16.mxu0 0
        %1105 = vmatpush1.bf16.msra.mxu0 0
        %1106 = vmatprep.subr.bf16.mxu0 0
        %1107 = vmatpush1.bf16.msra.mxu0 0
        %1108 = vmatprep.subr.bf16.mxu0 0
        %1109 = vmatpush1.bf16.msra.mxu0 0
        %1110 = vmatprep.subr.bf16.mxu0 0
        %1111 = vmatpush1.bf16.msra.mxu0 0
        %1112 = vmatprep.subr.bf16.mxu0 0
        %1113 = vmatpush1.bf16.msra.mxu0 0
        %1114 = vmatprep.subr.bf16.mxu0 0
        %1115 = vmatpush1.bf16.msra.mxu0 0
        %1116 = vmatprep.subr.bf16.mxu0 0
        %1117 = vmatpush1.bf16.msra.mxu0 0
        %1118 = vmatprep.mubr.bf16.mxu0 0
        %1119 = vmatmul.mubr.bf16.gmra.mrb[0].mxu0 %v1074
        %v1120 = vpop.f32.mrb[0].mxu0
        %v1121 = vadd.f32 0.0, %v1120
        %v1122 = vpop.f32.mrb[0].mxu0
        %v1123 = vadd.f32 0.0, %v1122
        %v1124 = vpop.f32.mrb[0].mxu0
        %v1125 = vpop.f32.mrb[0].mxu0
        %1126 = vdwg.mxu0
        %v1127 = vmax.f32 %v1121, 0.0
        %v1128 = vmax.f32 %v1123, 0.0
        %1129 = vst [vmem:[#allocation2 + $0x8] sm:$0xff] %v1127
        %1130 = vst [vmem:[#allocation2 + $0x10] sm:$0xff] %v1128
        %v1131 = vld [vmem:[#allocation2] sm:$0xff]
        %v1132 = vld [vmem:[#allocation2 + $0x8] sm:$0xff]
        %v1133 = vld [vmem:[#allocation2 + $0x10] sm:$0xff]
        %v1134 = vld [vmem:[#allocation7] ss:$8 sm:$0x3]
        %v1136 = vlaneseq
        %v1137 = vshrl.u32 %v1136, 7
        %v1138 = vsub.s32 0, %v1137
        %v1139 = vrot.slane %v1134, %v1138
        %v1140 = vlaneseq
        %v1141 = vshrl.u32 %v1140, 7
        %v1142 = vsub.s32 1, %v1141
        %v1143 = vrot.slane %v1134, %v1142
        %1144 = vrot.lane.b32.xlu0 %v1139, 111
        %v1145 = vpop.permute.xlu0 %1144
        %1146 = vrot.lane.b32.xlu0 %v1143, 111
        %v1147 = vpop.permute.xlu0 %1146
        %v1148 = vsel %vm284, %v1145, %v1147
        %v1152 = vmul.f32 %v1131, %v1145
        %v1153 = vmul.f32 %v1132, %v1148
        %v1154 = vmul.f32 %v1133, %v1147
        %1158 = vrot.lane.b32.xlu0 %v1152, 17
        %v1159 = vpop.permute.xlu0 %1158
        %1160 = vrot.lane.b32.xlu0 %v1153, 17
        %v1161 = vpop.permute.xlu0 %1160
        %1162 = vrot.lane.b32.xlu0 %v1154, 17
        %v1163 = vpop.permute.xlu0 %1162
        %v1164 = vsel %vm301, %v1159, %v1161
        %v1165 = vsel %vm301, %v1161, %v1163
        %1168 = vst [vmem:[#allocation3] sm:$0xff] %v1164
        %1169 = vst [vmem:[#allocation3 + $0x8] sm:$0xff] %v1165
        %v1170 = vld [vmem:[#allocation2] sm:$0xff]
        %v1171 = vld [vmem:[#allocation2 + $0x8] sm:$0xff]
        %v1172 = vld [vmem:[#allocation2 + $0x10] sm:$0xff]
        %v1173 = vld [vmem:[%s311] ss:$8 sm:$0x3]
        %v1175 = vlaneseq
        %v1176 = vshrl.u32 %v1175, 7
        %v1177 = vsub.s32 0, %v1176
        %v1178 = vrot.slane %v1173, %v1177
        %v1179 = vlaneseq
        %v1180 = vshrl.u32 %v1179, 7
        %v1181 = vsub.s32 1, %v1180
        %v1182 = vrot.slane %v1173, %v1181
        %1183 = vrot.lane.b32.xlu0 %v1178, 112
        %v1184 = vpop.permute.xlu0 %1183
        %1185 = vrot.lane.b32.xlu0 %v1182, 112
        %v1186 = vpop.permute.xlu0 %1185
        %v1187 = vsel %vm326, %v1184, %v1186
        %v1191 = vmul.f32 %v1170, %v1184
        %v1192 = vmul.f32 %v1171, %v1187
        %v1193 = vmul.f32 %v1172, %v1186
        %1197 = vrot.lane.b32.xlu0 %v1191, 16
        %v1198 = vpop.permute.xlu0 %1197
        %1199 = vrot.lane.b32.xlu0 %v1192, 16
        %v1200 = vpop.permute.xlu0 %1199
        %1201 = vrot.lane.b32.xlu0 %v1193, 16
        %v1202 = vpop.permute.xlu0 %1201
        %v1203 = vsel %vm346, %v1198, %v1200
        %v1204 = vsel %vm346, %v1200, %v1202
        %1207 = vst [vmem:[#allocation3 + $0x10] sm:$0xff] %v1203
        %1208 = vst [vmem:[#allocation3 + $0x18] sm:$0xff] %v1204
        %v1209 = vld [vmem:[#allocation2] sm:$0xff]
        %v1210 = vld [vmem:[#allocation2 + $0x8] sm:$0xff]
        %v1211 = vld [vmem:[#allocation2 + $0x10] sm:$0xff]
        %v1212 = vld [vmem:[%s356] ss:$8 sm:$0x3]
        %v1214 = vlaneseq
        %v1215 = vshrl.u32 %v1214, 7
        %v1216 = vsub.s32 0, %v1215
        %v1217 = vrot.slane %v1212, %v1216
        %v1218 = vlaneseq
        %v1219 = vshrl.u32 %v1218, 7
        %v1220 = vsub.s32 1, %v1219
        %v1221 = vrot.slane %v1212, %v1220
        %1222 = vrot.lane.b32.xlu0 %v1217, 113
        %v1223 = vpop.permute.xlu0 %1222
        %1224 = vrot.lane.b32.xlu0 %v1221, 113
        %v1225 = vpop.permute.xlu0 %1224
        %v1226 = vsel %vm371, %v1223, %v1225
        %v1230 = vmul.f32 %v1209, %v1223
        %v1231 = vmul.f32 %v1210, %v1226
        %v1232 = vmul.f32 %v1211, %v1225
        %1236 = vrot.lane.b32.xlu0 %v1230, 15
        %v1237 = vpop.permute.xlu0 %1236
        %1238 = vrot.lane.b32.xlu0 %v1231, 15
        %v1239 = vpop.permute.xlu0 %1238
        %1240 = vrot.lane.b32.xlu0 %v1232, 15
        %v1241 = vpop.permute.xlu0 %1240
        %v1242 = vsel %vm388, %v1237, %v1239
        %v1243 = vsel %vm388, %v1239, %v1241
        %1246 = vst [vmem:[#allocation3 + $0x20] sm:$0xff] %v1242
        %1247 = vst [vmem:[#allocation3 + $0x28] sm:$0xff] %v1243
        %v1248 = vld [vmem:[#allocation2] sm:$0xff]
        %v1249 = vld [vmem:[#allocation2 + $0x8] sm:$0xff]
        %v1250 = vld [vmem:[#allocation2 + $0x10] sm:$0xff]
        %v1251 = vld [vmem:[%s398] ss:$8 sm:$0x3]
        %v1253 = vlaneseq
        %v1254 = vshrl.u32 %v1253, 7
        %v1255 = vsub.s32 0, %v1254
        %v1256 = vrot.slane %v1251, %v1255
        %v1257 = vlaneseq
        %v1258 = vshrl.u32 %v1257, 7
        %v1259 = vsub.s32 1, %v1258
        %v1260 = vrot.slane %v1251, %v1259
        %1261 = vrot.lane.b32.xlu0 %v1256, 127
        %v1262 = vpop.permute.xlu0 %1261
        %1263 = vrot.lane.b32.xlu0 %v1260, 127
        %v1264 = vpop.permute.xlu0 %1263
        %v1265 = vsel %vm413, %v1262, %v1264
        %v1269 = vmul.f32 %v1248, %v1262
        %v1270 = vmul.f32 %v1249, %v1265
        %v1271 = vmul.f32 %v1250, %v1264
        %1275 = vrot.lane.b32.xlu0 %v1269, 1
        %v1276 = vpop.permute.xlu0 %1275
        %1277 = vrot.lane.b32.xlu0 %v1270, 1
        %v1278 = vpop.permute.xlu0 %1277
        %1279 = vrot.lane.b32.xlu0 %v1271, 1
        %v1280 = vpop.permute.xlu0 %1279
        %v1281 = vsel %vm433, %v1276, %v1278
        %v1282 = vsel %vm433, %v1278, %v1280
        %1285 = vst [vmem:[#allocation3 + $0x30] sm:$0xff] %v1281
        %1286 = vst [vmem:[#allocation3 + $0x38] sm:$0xff] %v1282
        %v1287 = vld [vmem:[#allocation2 + $0x8] sm:$0xff]
        %v1288 = vld [vmem:[#allocation2 + $0x10] sm:$0xff]
        %v1289 = vld [vmem:[%s442] ss:$8 sm:$0x3]
        %v1291 = vlaneseq
        %v1292 = vshrl.u32 %v1291, 7
        %v1293 = vsub.s32 0, %v1292
        %v1294 = vrot.slane %v1289, %v1293
        %v1295 = vlaneseq
        %v1296 = vshrl.u32 %v1295, 7
        %v1297 = vsub.s32 1, %v1296
        %v1298 = vrot.slane %v1289, %v1297
        %v1301 = vmul.f32 %v1287, %v1294
        %v1302 = vmul.f32 %v1288, %v1298
        %1303 = vst [vmem:[#allocation3 + $0x40] sm:$0xff] %v1301
        %1304 = vst [vmem:[#allocation3 + $0x48] sm:$0xff] %v1302
        %v1305 = vld [vmem:[#allocation2 + $0x8] sm:$0xff]
        %v1306 = vld [vmem:[#allocation2 + $0x10] sm:$0xff]
        %v1307 = vld [vmem:[#allocation2 + $0x18] sm:$0xff]
        %v1308 = vld [vmem:[%s462] ss:$8 sm:$0x3]
        %v1310 = vlaneseq
        %v1311 = vshrl.u32 %v1310, 7
        %v1312 = vsub.s32 0, %v1311
        %v1313 = vrot.slane %v1308, %v1312
        %v1314 = vlaneseq
        %v1315 = vshrl.u32 %v1314, 7
        %v1316 = vsub.s32 1, %v1315
        %v1317 = vrot.slane %v1308, %v1316
        %1318 = vrot.lane.b32.xlu0 %v1313, 1
        %v1319 = vpop.permute.xlu0 %1318
        %1320 = vrot.lane.b32.xlu0 %v1317, 1
        %v1321 = vpop.permute.xlu0 %1320
        %v1322 = vsel %vm433, %v1319, %v1321
        %v1326 = vmul.f32 %v1305, %v1319
        %v1327 = vmul.f32 %v1306, %v1322
        %v1328 = vmul.f32 %v1307, %v1321
        %1332 = vrot.lane.b32.xlu0 %v1326, 127
        %v1333 = vpop.permute.xlu0 %1332
        %1334 = vrot.lane.b32.xlu0 %v1327, 127
        %v1335 = vpop.permute.xlu0 %1334
        %1336 = vrot.lane.b32.xlu0 %v1328, 127
        %v1337 = vpop.permute.xlu0 %1336
        %v1338 = vsel %vm413, %v1333, %v1335
        %v1339 = vsel %vm413, %v1335, %v1337
        %1342 = vst [vmem:[#allocation3 + $0x50] sm:$0xff] %v1338
        %1343 = vst [vmem:[#allocation3 + $0x58] sm:$0xff] %v1339
        %v1344 = vld [vmem:[#allocation2 + $0x8] sm:$0xff]
        %v1345 = vld [vmem:[#allocation2 + $0x10] sm:$0xff]
        %v1346 = vld [vmem:[#allocation2 + $0x18] sm:$0xff]
        %v1347 = vld [vmem:[%s505] ss:$8 sm:$0x3]
        %v1349 = vlaneseq
        %v1350 = vshrl.u32 %v1349, 7
        %v1351 = vsub.s32 0, %v1350
        %v1352 = vrot.slane %v1347, %v1351
        %v1353 = vlaneseq
        %v1354 = vshrl.u32 %v1353, 7
        %v1355 = vsub.s32 1, %v1354
        %v1356 = vrot.slane %v1347, %v1355
        %1357 = vrot.lane.b32.xlu0 %v1352, 15
        %v1358 = vpop.permute.xlu0 %1357
        %1359 = vrot.lane.b32.xlu0 %v1356, 15
        %v1360 = vpop.permute.xlu0 %1359
        %v1361 = vsel %vm388, %v1358, %v1360
        %v1365 = vmul.f32 %v1344, %v1358
        %v1366 = vmul.f32 %v1345, %v1361
        %v1367 = vmul.f32 %v1346, %v1360
        %1371 = vrot.lane.b32.xlu0 %v1365, 113
        %v1372 = vpop.permute.xlu0 %1371
        %1373 = vrot.lane.b32.xlu0 %v1366, 113
        %v1374 = vpop.permute.xlu0 %1373
        %1375 = vrot.lane.b32.xlu0 %v1367, 113
        %v1376 = vpop.permute.xlu0 %1375
        %v1377 = vsel %vm371, %v1372, %v1374
        %v1378 = vsel %vm371, %v1374, %v1376
        %1381 = vst [vmem:[#allocation3 + $0x60] sm:$0xff] %v1377
        %1382 = vst [vmem:[#allocation3 + $0x68] sm:$0xff] %v1378
        %v1383 = vld [vmem:[#allocation2 + $0x8] sm:$0xff]
        %v1384 = vld [vmem:[#allocation2 + $0x10] sm:$0xff]
        %v1385 = vld [vmem:[#allocation2 + $0x18] sm:$0xff]
        %v1386 = vld [vmem:[%s545] ss:$8 sm:$0x3]
        %v1388 = vlaneseq
        %v1389 = vshrl.u32 %v1388, 7
        %v1390 = vsub.s32 0, %v1389
        %v1391 = vrot.slane %v1386, %v1390
        %v1392 = vlaneseq
        %v1393 = vshrl.u32 %v1392, 7
        %v1394 = vsub.s32 1, %v1393
        %v1395 = vrot.slane %v1386, %v1394
        %1396 = vrot.lane.b32.xlu0 %v1391, 16
        %v1397 = vpop.permute.xlu0 %1396
        %1398 = vrot.lane.b32.xlu0 %v1395, 16
        %v1399 = vpop.permute.xlu0 %1398
        %v1400 = vsel %vm346, %v1397, %v1399
        %v1404 = vmul.f32 %v1383, %v1397
        %v1405 = vmul.f32 %v1384, %v1400
        %v1406 = vmul.f32 %v1385, %v1399
        %1410 = vrot.lane.b32.xlu0 %v1404, 112
        %v1411 = vpop.permute.xlu0 %1410
        %1412 = vrot.lane.b32.xlu0 %v1405, 112
        %v1413 = vpop.permute.xlu0 %1412
        %1414 = vrot.lane.b32.xlu0 %v1406, 112
        %v1415 = vpop.permute.xlu0 %1414
        %v1416 = vsel %vm326, %v1411, %v1413
        %v1417 = vsel %vm326, %v1413, %v1415
        %1420 = vst [vmem:[#allocation3 + $0x70] sm:$0xff] %v1416
        %1421 = vst [vmem:[#allocation3 + $0x78] sm:$0xff] %v1417
        %v1422 = vld [vmem:[#allocation2 + $0x8] sm:$0xff]
        %v1423 = vld [vmem:[#allocation2 + $0x10] sm:$0xff]
        %v1424 = vld [vmem:[#allocation2 + $0x18] sm:$0xff]
        %v1425 = vld [vmem:[%s588] ss:$8 sm:$0x3]
        %v1427 = vlaneseq
        %v1428 = vshrl.u32 %v1427, 7
        %v1429 = vsub.s32 0, %v1428
        %v1430 = vrot.slane %v1425, %v1429
        %v1431 = vlaneseq
        %v1432 = vshrl.u32 %v1431, 7
        %v1433 = vsub.s32 1, %v1432
        %v1434 = vrot.slane %v1425, %v1433
        %1435 = vrot.lane.b32.xlu0 %v1430, 17
        %v1436 = vpop.permute.xlu0 %1435
        %1437 = vrot.lane.b32.xlu0 %v1434, 17
        %v1438 = vpop.permute.xlu0 %1437
        %v1439 = vsel %vm301, %v1436, %v1438
        %v1443 = vmul.f32 %v1422, %v1436
        %v1444 = vmul.f32 %v1423, %v1439
        %v1445 = vmul.f32 %v1424, %v1438
        %1449 = vrot.lane.b32.xlu0 %v1443, 111
        %v1450 = vpop.permute.xlu0 %1449
        %1451 = vrot.lane.b32.xlu0 %v1444, 111
        %v1452 = vpop.permute.xlu0 %1451
        %1453 = vrot.lane.b32.xlu0 %v1445, 111
        %v1454 = vpop.permute.xlu0 %1453
        %v1455 = vsel %vm284, %v1450, %v1452
        %v1456 = vsel %vm284, %v1452, %v1454
        %1459 = vst [vmem:[#allocation3 + $0x80] sm:$0xff] %v1455
        %1460 = vst [vmem:[#allocation3 + $0x88] sm:$0xff] %v1456
        %1461 = vst.msk [vmem:[%s1038] ss:$8 sm:$0x3] %vm628, 1.0
        %1462 = vst.msk [vmem:[%s1038] ss:$8 sm:$0x0] %vm628, 1.0
        %v1463 = vld [vmem:[#allocation3] sm:$0xff]
        %v1464 = vld [vmem:[#allocation3 + $0x8] sm:$0xff]
        %v1465 = vld [vmem:[#allocation3 + $0x10] sm:$0xff]
        %v1466 = vld [vmem:[#allocation3 + $0x18] sm:$0xff]
        %v1467 = vld [vmem:[#allocation3 + $0x20] sm:$0xff]
        %v1468 = vld [vmem:[#allocation3 + $0x28] sm:$0xff]
        %v1469 = vld [vmem:[#allocation3 + $0x30] sm:$0xff]
        %v1470 = vld [vmem:[#allocation3 + $0x38] sm:$0xff]
        %v1471 = vld [vmem:[#allocation3 + $0x40] sm:$0xff]
        %v1472 = vld [vmem:[#allocation3 + $0x48] sm:$0xff]
        %v1473 = vld [vmem:[#allocation3 + $0x50] sm:$0xff]
        %v1474 = vld [vmem:[#allocation3 + $0x58] sm:$0xff]
        %v1475 = vld [vmem:[#allocation3 + $0x60] sm:$0xff]
        %v1476 = vld [vmem:[#allocation3 + $0x68] sm:$0xff]
        %v1477 = vld [vmem:[#allocation3 + $0x70] sm:$0xff]
        %v1478 = vld [vmem:[#allocation3 + $0x78] sm:$0xff]
        %v1479 = vld [vmem:[#allocation3 + $0x80] sm:$0xff]
        %v1480 = vld [vmem:[#allocation3 + $0x88] sm:$0xff]
        %v1481 = vld [vmem:[#allocation3 + $0x90] sm:$0x1]
        %v1482 = vld [vmem:[#allocation3 + $0x98] sm:$0x1]
        %v1483 = vpack.c.bf16 %v1465, %v1463
        %v1484 = vpack.c.bf16 %v1466, %v1464
        %v1485 = vpack.c.bf16 %v1469, %v1467
        %v1486 = vpack.c.bf16 %v1470, %v1468
        %v1487 = vpack.c.bf16 %v1473, %v1471
        %v1488 = vpack.c.bf16 %v1474, %v1472
        %v1489 = vpack.c.bf16 %v1477, %v1475
        %v1490 = vpack.c.bf16 %v1478, %v1476
        %v1491 = vpack.c.bf16 %v1481, %v1479
        %v1492 = vpack.c.bf16 %v1482, %v1480
        %v1493 = vld [vmem:[%s4] sm:$0xf]
        %v1495 = vsel %vm1072, %v1493, 0
        %v1498 = vand.u32 %v1491, %v1079
        %v1501 = vand.u32 %v1492, %v1079
        %1503 = vmatprep.subr.bf16.mxu0 %v1484
        %1504 = vmatpush1.bf16.msra.mxu0 %v1483
        %1505 = vmatprep.subr.bf16.mxu0 %v1486
        %1506 = vmatpush1.bf16.msra.mxu0 %v1485
        %1507 = vmatprep.subr.bf16.mxu0 %v1488
        %1508 = vmatpush1.bf16.msra.mxu0 %v1487
        %1509 = vmatprep.subr.bf16.mxu0 %v1490
        %1510 = vmatpush1.bf16.msra.mxu0 %v1489
        %1511 = vmatprep.subr.bf16.mxu0 %v1501
        %1512 = vmatpush1.bf16.msra.mxu0 %v1498
        %1513 = vmatprep.subr.bf16.mxu0 0
        %1514 = vmatpush1.bf16.msra.mxu0 0
        %1515 = vmatprep.subr.bf16.mxu0 0
        %1516 = vmatpush1.bf16.msra.mxu0 0
        %1517 = vmatprep.subr.bf16.mxu0 0
        %1518 = vmatpush1.bf16.msra.mxu0 0
        %1519 = vmatprep.subr.bf16.mxu0 0
        %1520 = vmatpush1.bf16.msra.mxu0 0
        %1521 = vmatprep.subr.bf16.mxu0 0
        %1522 = vmatpush1.bf16.msra.mxu0 0
        %1523 = vmatprep.subr.bf16.mxu0 0
        %1524 = vmatpush1.bf16.msra.mxu0 0
        %1525 = vmatprep.subr.bf16.mxu0 0
        %1526 = vmatpush1.bf16.msra.mxu0 0
        %1527 = vmatprep.subr.bf16.mxu0 0
        %1528 = vmatpush1.bf16.msra.mxu0 0
        %1529 = vmatprep.subr.bf16.mxu0 0
        %1530 = vmatpush1.bf16.msra.mxu0 0
        %1531 = vmatprep.subr.bf16.mxu0 0
        %1532 = vmatpush1.bf16.msra.mxu0 0
        %1533 = vmatprep.subr.bf16.mxu0 0
        %1534 = vmatpush1.bf16.msra.mxu0 0
        %1535 = vmatprep.mubr.bf16.mxu0 0
        %1536 = vmatmul.mubr.bf16.gmra.mrb[0].mxu0 %v1495
        %v1537 = vpop.f32.mrb[0].mxu0
        %v1538 = vadd.f32 0.0, %v1537
        %v1539 = vpop.f32.mrb[0].mxu0
        %v1540 = vadd.f32 0.0, %v1539
        %v1541 = vpop.f32.mrb[0].mxu0
        %v1542 = vpop.f32.mrb[0].mxu0
        %1543 = vdwg.mxu0
        %v1544 = vxor.u32 %v1538, 2147483648
        %v1545 = vxor.u32 %v1540, 2147483648
        %v1546 = vmul.f32 %v1544, 1.442695
        %v1547 = vpow.pop %v1546
        %v1548 = vmul.f32 %v1545, 1.442695
        %v1549 = vpow.pop %v1548
        %v1550 = vadd.f32 %v1547, 1.0
        %v1551 = vadd.f32 %v1549, 1.0
        %v1552 = vrcp.pop %v1550
        %v1553 = vmul.f32 1.0, %v1552
        %v1554 = vrcp.pop %v1551
        %v1555 = vmul.f32 1.0, %v1554
        %1556 = vst [vmem:[%s255] sm:$0xff] %v1553
        %1557 = vst [vmem:[%s255 + $0x8] sm:$0xff] %v1555
        %s1558 = sand.u32 %s141, 1
        %s1559 = scalar_lea.sflag [#allocation6], %s1558
        %s1560 = sand.u32 %s141, 1
        %s1561 = smul.addr %s1560, 16
        %s1562 = scalar_lea.vmem [#allocation9], %s1561
        // Predicated region
        $region49: #{tpu_custom_call.1} parent=39 // pred_check
          %p1563 = pneg %p151
        $region50: #{tpu_custom_call.1} parent=39 // pred_check_branch
          %1565 = sbr.rel (%p1563) target = $region52
        $region51: #{tpu_custom_call.1} parent=39 // pred_region
          %s1567 = ssub.s32 256, 256
          %1568 = vsyncadd %s1559, %s1567
          %s1569 = smul.addr %s23, 2
          %s1570 = smul.addr %s1569, 128
          %s1571 = scalar_lea.hbm %s5, %s1570
          %s1573 = sshll.u32 %s1562, 4
          %s1574 = int_to_ptr.vmem [resolvable:$true] %s1573
          %1576 = dma.vmem_to_hbm [thread:$0]  %s1574, 256, %s1571, %s1559
        $region52: #{tpu_custom_call.1} parent=39 // pred_fallthru
          _
      $region40: #{tpu_custom_call.1} parent=5 // pred_fallthru
        _
      %p1577 = scmp.le.s32.totalorder 2, %s18
      // Predicated region
      $region53: #{tpu_custom_call.1} parent=5 // pred_check
        %p1578 = pneg %p1577
      $region54: #{tpu_custom_call.1} parent=5 // pred_check_branch
        %1580 = sbr.rel (%p1578) target = $region56
      $region55: #{tpu_custom_call.1} parent=5 // pred_region
        %s1581 = ssub.s32 %s18, 2
        // Predicated region
        $region57: #{tpu_custom_call.1} parent=55 // pred_check
          %p1582 = pneg %p157
        $region58: #{tpu_custom_call.1} parent=55 // pred_check_branch
          %1584 = sbr.rel (%p1582) target = $region60
        $region59: #{tpu_custom_call.1} parent=55 // pred_region
          %s1585 = sand.u32 %s142, 1
          %s1586 = scalar_lea.sflag [#allocation6], %s1585
          %s1587 = sand.u32 %s142, 1
          %s1588 = smul.addr %s1587, 16
          %s1589 = scalar_lea.vmem [#allocation9], %s1588
          %1590 = dma.done %s1586, 256
        $region60: #{tpu_custom_call.1} parent=55 // pred_fallthru
          _
      $region56: #{tpu_custom_call.1} parent=5 // pred_fallthru
        _
    $region6: #{tpu_custom_call.1} parent=1 // loop_footer
      %s22 = sadd.s32 1, %s18
    $region7: #{tpu_custom_call.1} parent=1 // loop_footer_branch
      %17 = sbr.rel target = $region3
    $region8: #{tpu_custom_call.1} parent=1 // loop_exit
      _
    %1591 = vsyncpa [#allocation5], 1
    %s1592 = scalar_lea.sflag [#allocation5], 1
    %1593 = vsyncpa %s1592, 1
    %1594 = vsyncpa [#allocation8], 1
    %1595 = vsyncpa [#allocation6], 1
    %s1596 = scalar_lea.sflag [#allocation6], 1
    %1597 = vsyncpa %s1596, 1

</llo_original>
